<compile_context>
chip_gen: v7x
topology: tpu7x:2x2x1
jax: 0.10.0
libtpu: 0.0.40
codegen_flags: <defaults>
</compile_context>

<pallas_src>
import functools

import jax
import jax.numpy as jnp
import numpy as np
from jax import lax
from jax.experimental import pallas as pl
from jax.experimental.pallas import tpu as pltpu


# ----------------------------------------------------------------------------
# Fused Pallas kernel: grid = (head in {cls, reg}, layer in 0..4).
# ----------------------------------------------------------------------------
def _make_header_kernel(N, H, W, C):
    M = N * H * W          # batch/space folded into matmul M
    K = 9 * C              # 3x3 * Cin contraction

    def kernel(x_ref, w_ref, b_ref, o_ref, act_ref, lhs_ref):
        h_id = pl.program_id(0)                 # 0 = cls head, 1 = reg head
        l_id = pl.program_id(1)                 # layer index 0..4
        n_layers = pl.num_programs(1)

        # Layer 0 of each head starts from the shared input feature map.
        # (Per-head init is required: on v7x core-parallel each core owns its
        #  own scratch, so never gate this on the head index.)
        @pl.when(l_id == 0)
        def _():
            act_ref[...] = x_ref[...]

        # ---- im2col LHS build into a lane/sublane-aligned (M, 9C) scratch ---
        # act is (N, H, W=8, C=128): W = exactly one sublane tile, C = lanes.
        # W-shifts use slice + zero-concat along the sublane axis (lowers to
        # XLU sublane shifts + selects); H-shifts are vreg-granular slices.
        # Every store targets a full-sublane, lane-aligned 128-wide column.
        a = act_ref[...].astype(jnp.bfloat16)
        zrow = jnp.zeros((N, 1, W, C), jnp.bfloat16)
        zcol = jnp.zeros((N, H, 1, C), jnp.bfloat16)

        for kx in range(3):                      # kx outer: one W-shift per kx
            dx = kx - 1
            if dx == -1:
                aw = jnp.concatenate([zcol, a[:, :, :W - 1, :]], axis=2)
            elif dx == 0:
                aw = a
            else:
                aw = jnp.concatenate([a[:, :, 1:, :], zcol], axis=2)
            for ky in range(3):
                dy = ky - 1
                if dy == -1:
                    tap = jnp.concatenate([zrow, aw[:, :H - 1]], axis=1)
                elif dy == 0:
                    tap = aw
                else:
                    tap = jnp.concatenate([aw[:, 1:], zrow], axis=1)
                k = ky * 3 + kx                  # matches weight row order
                lhs_ref[:, k * C:(k + 1) * C] = tap.reshape(M, C)

        # ---- one MXU matmul per layer: (M, 9C) x (9C, C), bf16 in, f32 acc --
        y = jnp.dot(lhs_ref[...], w_ref[0, 0],
                    preferred_element_type=jnp.float32)       # (M, C) f32
        y = y + b_ref[0, 0]

        is_last = l_id == n_layers - 1

        @pl.when(jnp.logical_not(is_last))
        def _():
            act_ref[...] = jnp.maximum(y, 0.0).reshape(N, H, W, C)

        @pl.when(jnp.logical_and(is_last, h_id == 0))
        def _():
            o_ref[0] = jax.nn.sigmoid(y).reshape(N, H, W, C).astype(o_ref.dtype)

        @pl.when(jnp.logical_and(is_last, h_id != 0))
        def _():
            o_ref[0] = y.reshape(N, H, W, C).astype(o_ref.dtype)

    return kernel


def header_pallas(x_nhwc, w_all, b_all):
    """Runs both heads fused. Returns slab (2, N, H, W, 128):
    slab[0, ..., 0:1] = cls (sigmoid), slab[1, ..., 0:6] = reg."""
    N, H, W, C = x_nhwc.shape
    K = 9 * C
    M = N * H * W
    kernel = _make_header_kernel(N, H, W, C)
    return pl.pallas_call(
        kernel,
        out_shape=jax.ShapeDtypeStruct((2, N, H, W, C), jnp.float32),
        grid=(2, 5),                                  # (head, layer)
        in_specs=[
            pl.BlockSpec((N, H, W, C), lambda h, l: (0, 0, 0, 0)),   # shared x
            pl.BlockSpec((1, 1, K, C), lambda h, l: (h, l, 0, 0)),   # weights
            pl.BlockSpec((1, 1, 1, C), lambda h, l: (h, l, 0, 0)),   # biases
        ],
        out_specs=pl.BlockSpec((1, N, H, W, C), lambda h, l: (h, 0, 0, 0, 0)),
        scratch_shapes=[
            pltpu.VMEM((N, H, W, C), jnp.float32),    # activation (persists over l)
            pltpu.VMEM((M, K), jnp.bfloat16),         # im2col LHS (reused every layer)
        ],
        compiler_params=pltpu.CompilerParams(
            dimension_semantics=("parallel", "arbitrary"),
            vmem_limit_bytes=32 * 1024 * 1024),
    )(x_nhwc, w_all, b_all)


# ----------------------------------------------------------------------------
# Parameter construction (deterministic, synthetic) + packing for the kernel.
# ----------------------------------------------------------------------------
_BN_EPS = 1e-5


def _init_conv_bn(key, cin, cout, with_bn=True):
    kw, kb, kg, kbe, km, kv = jax.random.split(key, 6)
    w = 0.05 * jax.random.normal(kw, (3, 3, cin, cout), jnp.float32)  # HWIO
    b = 0.05 * jax.random.normal(kb, (cout,), jnp.float32)
    if with_bn:
        gamma = 1.0 + 0.1 * jax.random.normal(kg, (cout,), jnp.float32)
        beta = 0.1 * jax.random.normal(kbe, (cout,), jnp.float32)
        rmean = 0.1 * jax.random.normal(km, (cout,), jnp.float32)
        rvar = 1.0 + 0.1 * jax.random.uniform(kv, (cout,), jnp.float32)
        s = gamma / jnp.sqrt(rvar + _BN_EPS)
        scale = s
        bias = b * s + (beta - rmean * s)   # fold conv bias + BN affine
    else:
        scale = jnp.ones((cout,), jnp.float32)
        bias = b
    return {"w": w, "scale": scale, "bias": bias}


def init_header_params(seed=0):
    key = jax.random.PRNGKey(seed)
    keys = jax.random.split(key, 10)
    cls_layers = []
    for i in range(4):
        cls_layers.append((_init_conv_bn(keys[i], 128, 128, True), "relu"))
    cls_layers.append((_init_conv_bn(keys[4], 128, 1, True), "sigmoid"))

    reg_layers = []
    for i in range(4):
        reg_layers.append((_init_conv_bn(keys[5 + i], 128, 128, True), "relu"))
    reg_layers.append((_init_conv_bn(keys[9], 128, 6, False), "none"))
    return {"cls": cls_layers, "reg": reg_layers}


def pack_header_params(params):
    """Fold BN scale into the weights (f32), flatten to (9*Cin, Cout), zero-pad
    Cout -> 128, stack to (2 heads, 5 layers, ...) and cast weights to bf16."""
    cin = 128

    def fold_w_flat(p):
        w = p["w"] * p["scale"][None, None, None, :]        # fold BN scale (f32)
        return w.reshape(9 * cin, -1)

    w_heads, b_heads = [], []
    for head in ("cls", "reg"):
        ws, bs = [], []
        for p, _ in params[head]:
            wf = fold_w_flat(p)                              # (1152, cout)
            cout = wf.shape[1]
            ws.append(jnp.zeros((9 * cin, cin), jnp.float32).at[:, :cout].set(wf))
            bs.append(jnp.zeros((cin,), jnp.float32).at[:cout].set(p["bias"]))
        w_heads.append(jnp.stack(ws))                        # (5, 1152, 128)
        b_heads.append(jnp.stack(bs))                        # (5, 128)

    w_all = jnp.stack(w_heads).astype(jnp.bfloat16)          # (2, 5, 1152, 128) bf16
    b_all = jnp.stack(b_heads)[:, :, None, :]                # (2, 5, 1, 128)   f32
    return w_all, b_all


# ----------------------------------------------------------------------------
# Header forward (Pallas). Input/output in NCHW to match the PyTorch module.
# ----------------------------------------------------------------------------
def header_forward(params, x_nchw):
    x = jnp.transpose(x_nchw, (0, 2, 3, 1))                  # -> NHWC
    w_all, b_all = pack_header_params(params)
    slab = header_pallas(x, w_all, b_all)                    # (2, N, H, W, 128)
    confs = jnp.transpose(slab[0, :, :, :, 0:1], (0, 3, 1, 2))   # (N, 1, H, W)
    locs = jnp.transpose(slab[1, :, :, :, 0:6], (0, 3, 1, 2))    # (N, 6, H, W)
    return confs, locs


# ----------------------------------------------------------------------------
# Pure-JAX reference (lax.conv). compute_dtype=bf16 models the kernel's
# bf16-input / f32-accumulate arithmetic exactly; f32 is the module semantics.
# ----------------------------------------------------------------------------
def header_forward_ref(params, x_nchw, compute_dtype=jnp.float32):
    x = jnp.transpose(x_nchw, (0, 2, 3, 1)).astype(jnp.float32)

    def run(layers):
        h = x
        for p, act in layers:
            w = (p["w"] * p["scale"][None, None, None, :]).astype(compute_dtype)
            y = lax.conv_general_dilated(
                h.astype(compute_dtype), w, window_strides=(1, 1), padding="SAME",
                dimension_numbers=("NHWC", "HWIO", "NHWC"),
                preferred_element_type=jnp.float32)
            y = y + p["bias"]
            if act == "relu":
                y = jnp.maximum(y, 0.0)
            elif act == "sigmoid":
                y = jax.nn.sigmoid(y)
            h = y
        return h

    confs = jnp.transpose(run(params["cls"]), (0, 3, 1, 2))
    locs = jnp.transpose(run(params["reg"]), (0, 3, 1, 2))
    return confs, locs


if __name__ == "__main__":
    params = init_header_params(seed=0)

    # Small NCHW input consistent with the module: channels must be 128.
    key = jax.random.PRNGKey(0)
    x = jax.random.normal(key, (2, 128, 8, 8), jnp.float32)

    fwd = jax.jit(functools.partial(header_forward, params))
    confs, locs = fwd(x)
    jax.block_until_ready((confs, locs))

    assert confs.shape == (2, 1, 8, 8), confs.shape
    assert locs.shape == (2, 6, 8, 8), locs.shape

    # Strict check vs a reference that models the kernel's arithmetic exactly
    # (bf16 MXU inputs, f32 accumulation) -> validates padding, im2col tap
    # ordering, BN folding, bias, and activations.
    confs_q, locs_q = jax.jit(functools.partial(
        header_forward_ref, params, compute_dtype=jnp.bfloat16))(x)
    np.testing.assert_allclose(np.asarray(confs), np.asarray(confs_q),
                               rtol=2e-3, atol=2e-3)
    np.testing.assert_allclose(np.asarray(locs), np.asarray(locs_q),
                               rtol=2e-3, atol=2e-3)

    # Loose sanity bound vs the pure-f32 module semantics (bounds bf16 drift
    # accumulated over the 5 stacked conv layers).
    confs_f, locs_f = jax.jit(functools.partial(header_forward_ref, params))(x)
    np.testing.assert_allclose(np.asarray(confs), np.asarray(confs_f),
                               rtol=1e-1, atol=1e-1)
    np.testing.assert_allclose(np.asarray(locs), np.asarray(locs_f),
                               rtol=1e-1, atol=2e-1)

    print("KERNEL_OK")
</pallas_src>

<mosaic_0001>
module attributes {stable_mosaic.version = 11 : i64} {
  func.func @kernel(%arg0: i32, %arg1: i32, %arg2: memref<2x8x8x128xf32, #tpu.memory_space<vmem>>, %arg3: memref<1x1x1152x128xbf16, #tpu.memory_space<vmem>>, %arg4: memref<1x1x1x128xf32, #tpu.memory_space<vmem>>, %arg5: memref<1x2x8x8x128xf32, #tpu.memory_space<vmem>>, %arg6: memref<2x8x8x128xf32, #tpu.memory_space<vmem>>, %arg7: memref<128x1152xbf16, #tpu.memory_space<vmem>>) attributes {dimension_semantics = [#tpu.dimension_semantics<parallel>, #tpu.dimension_semantics<arbitrary>], iteration_bounds = array<i64: 2, 5>, scalar_prefetch = 0 : i64, scratch_operands = 2 : i64, tpu.core_type = #tpu.core_type<tc>, window_params = [{pipeline_mode = #tpu.pipeline_mode<synchronous>, transform_indices = @transform_0, window_bounds = array<i64: 2, 8, 8, 128>}, {transform_indices = @transform_1, window_bounds = array<i64: 1, 1, 1152, 128>}, {transform_indices = @transform_2, window_bounds = array<i64: 1, 1, 1, 128>}, {transform_indices = @transform_3, window_bounds = array<i64: 1, 2, 8, 8, 128>}]} {
    %c0_i32 = arith.constant 0 : i32
    %0 = arith.cmpi eq, %arg1, %c0_i32 : i32
    %1 = arith.extui %0 : i1 to i32
    %c0_i32_0 = arith.constant 0 : i32
    %2 = arith.cmpi ne, %1, %c0_i32_0 : i32
    scf.if %2 {
      %c0_31 = arith.constant 0 : index
      %c0_32 = arith.constant 0 : index
      %c0_33 = arith.constant 0 : index
      %c0_34 = arith.constant 0 : index
      %61 = vector.load %arg2[%c0_31, %c0_32, %c0_33, %c0_34] : memref<2x8x8x128xf32, #tpu.memory_space<vmem>>, vector<2x8x8x128xf32>
      %c0_35 = arith.constant 0 : index
      %c0_36 = arith.constant 0 : index
      %c0_37 = arith.constant 0 : index
      %c0_38 = arith.constant 0 : index
      %62 = vector.load %arg6[%c0_35, %c0_36, %c0_37, %c0_38] : memref<2x8x8x128xf32, #tpu.memory_space<vmem>>, vector<2x8x8x128xf32>
      tpu.vector_store %arg6[%c0_35, %c0_36, %c0_37, %c0_38], %61 {strides = array<i32>} : memref<2x8x8x128xf32, #tpu.memory_space<vmem>>, vector<2x8x8x128xf32>,
    } else {
    }
    %c0 = arith.constant 0 : index
    %c0_1 = arith.constant 0 : index
    %c0_2 = arith.constant 0 : index
    %c0_3 = arith.constant 0 : index
    %3 = vector.load %arg6[%c0, %c0_1, %c0_2, %c0_3] : memref<2x8x8x128xf32, #tpu.memory_space<vmem>>, vector<2x8x8x128xf32>
    %4 = arith.truncf %3 : vector<2x8x8x128xf32> to vector<2x8x8x128xbf16>
    %cst = arith.constant 0.000000e+00 : bf16
    %5 = vector.broadcast %cst : bf16 to vector<2x1x8x128xbf16>
    %cst_4 = arith.constant 0.000000e+00 : bf16
    %6 = vector.broadcast %cst_4 : bf16 to vector<2x8x1x128xbf16>
    %7 = vector.extract_strided_slice %4 {offsets = [0, 0, 0, 0], sizes = [2, 8, 7, 128], strides = [1, 1, 1, 1]} : vector<2x8x8x128xbf16> to vector<2x8x7x128xbf16>
    %8 = tpu.concatenate %6, %7 in 2 : vector<2x8x1x128xbf16>, vector<2x8x7x128xbf16> -> vector<2x8x8x128xbf16>
    %9 = vector.extract_strided_slice %8 {offsets = [0, 0, 0, 0], sizes = [2, 7, 8, 128], strides = [1, 1, 1, 1]} : vector<2x8x8x128xbf16> to vector<2x7x8x128xbf16>
    %10 = tpu.concatenate %5, %9 in 1 : vector<2x1x8x128xbf16>, vector<2x7x8x128xbf16> -> vector<2x8x8x128xbf16>
    %11 = vector.shape_cast %10 : vector<2x8x8x128xbf16> to vector<128x128xbf16>
    %c0_5 = arith.constant 0 : index
    %c0_6 = arith.constant 0 : index
    %12 = vector.load %arg7[%c0_5, %c0_6] : memref<128x1152xbf16, #tpu.memory_space<vmem>>, vector<128x128xbf16>
    tpu.vector_store %arg7[%c0_5, %c0_6], %11 {strides = array<i32>} : memref<128x1152xbf16, #tpu.memory_space<vmem>>, vector<128x128xbf16>,
    %13 = vector.shape_cast %8 : vector<2x8x8x128xbf16> to vector<128x128xbf16>
    %c0_7 = arith.constant 0 : index
    %c384 = arith.constant 384 : index
    %14 = vector.load %arg7[%c0_7, %c384] : memref<128x1152xbf16, #tpu.memory_space<vmem>>, vector<128x128xbf16>
    tpu.vector_store %arg7[%c0_7, %c384], %13 {strides = array<i32>} : memref<128x1152xbf16, #tpu.memory_space<vmem>>, vector<128x128xbf16>,
    %15 = vector.extract_strided_slice %8 {offsets = [0, 1, 0, 0], sizes = [2, 7, 8, 128], strides = [1, 1, 1, 1]} : vector<2x8x8x128xbf16> to vector<2x7x8x128xbf16>
    %16 = tpu.concatenate %15, %5 in 1 : vector<2x7x8x128xbf16>, vector<2x1x8x128xbf16> -> vector<2x8x8x128xbf16>
    %17 = vector.shape_cast %16 : vector<2x8x8x128xbf16> to vector<128x128xbf16>
    %c0_8 = arith.constant 0 : index
    %c768 = arith.constant 768 : index
    %18 = vector.load %arg7[%c0_8, %c768] : memref<128x1152xbf16, #tpu.memory_space<vmem>>, vector<128x128xbf16>
    tpu.vector_store %arg7[%c0_8, %c768], %17 {strides = array<i32>} : memref<128x1152xbf16, #tpu.memory_space<vmem>>, vector<128x128xbf16>,
    %19 = vector.extract_strided_slice %4 {offsets = [0, 0, 0, 0], sizes = [2, 7, 8, 128], strides = [1, 1, 1, 1]} : vector<2x8x8x128xbf16> to vector<2x7x8x128xbf16>
    %20 = tpu.concatenate %5, %19 in 1 : vector<2x1x8x128xbf16>, vector<2x7x8x128xbf16> -> vector<2x8x8x128xbf16>
    %21 = vector.shape_cast %20 : vector<2x8x8x128xbf16> to vector<128x128xbf16>
    %c0_9 = arith.constant 0 : index
    %c128 = arith.constant 128 : index
    %22 = vector.load %arg7[%c0_9, %c128] : memref<128x1152xbf16, #tpu.memory_space<vmem>>, vector<128x128xbf16>
    tpu.vector_store %arg7[%c0_9, %c128], %21 {strides = array<i32>} : memref<128x1152xbf16, #tpu.memory_space<vmem>>, vector<128x128xbf16>,
    %23 = vector.shape_cast %4 : vector<2x8x8x128xbf16> to vector<128x128xbf16>
    %c0_10 = arith.constant 0 : index
    %c512 = arith.constant 512 : index
    %24 = vector.load %arg7[%c0_10, %c512] : memref<128x1152xbf16, #tpu.memory_space<vmem>>, vector<128x128xbf16>
    tpu.vector_store %arg7[%c0_10, %c512], %23 {strides = array<i32>} : memref<128x1152xbf16, #tpu.memory_space<vmem>>, vector<128x128xbf16>,
    %25 = vector.extract_strided_slice %4 {offsets = [0, 1, 0, 0], sizes = [2, 7, 8, 128], strides = [1, 1, 1, 1]} : vector<2x8x8x128xbf16> to vector<2x7x8x128xbf16>
    %26 = tpu.concatenate %25, %5 in 1 : vector<2x7x8x128xbf16>, vector<2x1x8x128xbf16> -> vector<2x8x8x128xbf16>
    %27 = vector.shape_cast %26 : vector<2x8x8x128xbf16> to vector<128x128xbf16>
    %c0_11 = arith.constant 0 : index
    %c896 = arith.constant 896 : index
    %28 = vector.load %arg7[%c0_11, %c896] : memref<128x1152xbf16, #tpu.memory_space<vmem>>, vector<128x128xbf16>
    tpu.vector_store %arg7[%c0_11, %c896], %27 {strides = array<i32>} : memref<128x1152xbf16, #tpu.memory_space<vmem>>, vector<128x128xbf16>,
    %29 = vector.extract_strided_slice %4 {offsets = [0, 0, 1, 0], sizes = [2, 8, 7, 128], strides = [1, 1, 1, 1]} : vector<2x8x8x128xbf16> to vector<2x8x7x128xbf16>
    %30 = tpu.concatenate %29, %6 in 2 : vector<2x8x7x128xbf16>, vector<2x8x1x128xbf16> -> vector<2x8x8x128xbf16>
    %31 = vector.extract_strided_slice %30 {offsets = [0, 0, 0, 0], sizes = [2, 7, 8, 128], strides = [1, 1, 1, 1]} : vector<2x8x8x128xbf16> to vector<2x7x8x128xbf16>
    %32 = tpu.concatenate %5, %31 in 1 : vector<2x1x8x128xbf16>, vector<2x7x8x128xbf16> -> vector<2x8x8x128xbf16>
    %33 = vector.shape_cast %32 : vector<2x8x8x128xbf16> to vector<128x128xbf16>
    %c0_12 = arith.constant 0 : index
    %c256 = arith.constant 256 : index
    %34 = vector.load %arg7[%c0_12, %c256] : memref<128x1152xbf16, #tpu.memory_space<vmem>>, vector<128x128xbf16>
    tpu.vector_store %arg7[%c0_12, %c256], %33 {strides = array<i32>} : memref<128x1152xbf16, #tpu.memory_space<vmem>>, vector<128x128xbf16>,
    %35 = vector.shape_cast %30 : vector<2x8x8x128xbf16> to vector<128x128xbf16>
    %c0_13 = arith.constant 0 : index
    %c640 = arith.constant 640 : index
    %36 = vector.load %arg7[%c0_13, %c640] : memref<128x1152xbf16, #tpu.memory_space<vmem>>, vector<128x128xbf16>
    tpu.vector_store %arg7[%c0_13, %c640], %35 {strides = array<i32>} : memref<128x1152xbf16, #tpu.memory_space<vmem>>, vector<128x128xbf16>,
    %37 = vector.extract_strided_slice %30 {offsets = [0, 1, 0, 0], sizes = [2, 7, 8, 128], strides = [1, 1, 1, 1]} : vector<2x8x8x128xbf16> to vector<2x7x8x128xbf16>
    %38 = tpu.concatenate %37, %5 in 1 : vector<2x7x8x128xbf16>, vector<2x1x8x128xbf16> -> vector<2x8x8x128xbf16>
    %39 = vector.shape_cast %38 : vector<2x8x8x128xbf16> to vector<128x128xbf16>
    %c0_14 = arith.constant 0 : index
    %c1024 = arith.constant 1024 : index
    %40 = vector.load %arg7[%c0_14, %c1024] : memref<128x1152xbf16, #tpu.memory_space<vmem>>, vector<128x128xbf16>
    tpu.vector_store %arg7[%c0_14, %c1024], %39 {strides = array<i32>} : memref<128x1152xbf16, #tpu.memory_space<vmem>>, vector<128x128xbf16>,
    %c0_15 = arith.constant 0 : index
    %c0_16 = arith.constant 0 : index
    %41 = vector.load %arg7[%c0_15, %c0_16] : memref<128x1152xbf16, #tpu.memory_space<vmem>>, vector<128x1152xbf16>
    %c0_17 = arith.constant 0 : index
    %c0_18 = arith.constant 0 : index
    %c0_19 = arith.constant 0 : index
    %c0_20 = arith.constant 0 : index
    %42 = vector.load %arg3[%c0_17, %c0_18, %c0_19, %c0_20] : memref<1x1x1152x128xbf16, #tpu.memory_space<vmem>>, vector<1x1x1152x128xbf16>
    %43 = vector.shape_cast %42 : vector<1x1x1152x128xbf16> to vector<1152x128xbf16>
    %cst_21 = arith.constant dense<0.000000e+00> : vector<128x128xf32>
    %44 = tpu.matmul %41, %43, %cst_21 {dimension_numbers = #tpu.dot_dimension_numbers<[1], [0], [0], [1], [0, 0, 1, 1], [], []>} : vector<128x1152xbf16>, vector<1152x128xbf16>, vector<128x128xf32> -> vector<128x128xf32>
    %c0_22 = arith.constant 0 : index
    %c0_23 = arith.constant 0 : index
    %c0_24 = arith.constant 0 : index
    %c0_25 = arith.constant 0 : index
    %45 = vector.load %arg4[%c0_22, %c0_23, %c0_24, %c0_25] : memref<1x1x1x128xf32, #tpu.memory_space<vmem>>, vector<1x1x1x128xf32>
    %46 = vector.shape_cast %45 : vector<1x1x1x128xf32> to vector<1x128xf32>
    %47 = vector.broadcast %46 : vector<1x128xf32> to vector<128x128xf32>
    %48 = arith.addf %44, %47 : vector<128x128xf32>
    %c4_i32 = arith.constant 4 : i32
    %49 = arith.cmpi eq, %arg1, %c4_i32 : i32
    %true = arith.constant true
    %50 = arith.xori %49, %true : i1
    %51 = arith.extui %50 : i1 to i32
    %c0_i32_26 = arith.constant 0 : i32
    %52 = arith.cmpi ne, %51, %c0_i32_26 : i32
    scf.if %52 {
      %cst_31 = arith.constant 0.000000e+00 : f32
      %61 = vector.broadcast %cst_31 : f32 to vector<128x128xf32>
      %62 = arith.maximumf %48, %61 : vector<128x128xf32>
      %63 = vector.shape_cast %62 : vector<128x128xf32> to vector<2x8x8x128xf32>
      %c0_32 = arith.constant 0 : index
      %c0_33 = arith.constant 0 : index
      %c0_34 = arith.constant 0 : index
      %c0_35 = arith.constant 0 : index
      %64 = vector.load %arg6[%c0_32, %c0_33, %c0_34, %c0_35] : memref<2x8x8x128xf32, #tpu.memory_space<vmem>>, vector<2x8x8x128xf32>
      tpu.vector_store %arg6[%c0_32, %c0_33, %c0_34, %c0_35], %63 {strides = array<i32>} : memref<2x8x8x128xf32, #tpu.memory_space<vmem>>, vector<2x8x8x128xf32>,
    } else {
    }
    %c0_i32_27 = arith.constant 0 : i32
    %53 = arith.cmpi eq, %arg0, %c0_i32_27 : i32
    %54 = arith.andi %49, %53 : i1
    %55 = arith.extui %54 : i1 to i32
    %c0_i32_28 = arith.constant 0 : i32
    %56 = arith.cmpi ne, %55, %c0_i32_28 : i32
    scf.if %56 {
      %61 = arith.negf %48 : vector<128x128xf32>
      %62 = math.exp %61 : vector<128x128xf32>
      %cst_31 = arith.constant 1.000000e+00 : f32
      %63 = vector.broadcast %cst_31 : f32 to vector<128x128xf32>
      %64 = arith.addf %63, %62 : vector<128x128xf32>
      %65 = arith.divf %63, %64 : vector<128x128xf32>
      %66 = vector.shape_cast %65 : vector<128x128xf32> to vector<2x8x8x128xf32>
      %c0_32 = arith.constant 0 : index
      %c0_33 = arith.constant 0 : index
      %c0_34 = arith.constant 0 : index
      %c0_35 = arith.constant 0 : index
      %c0_36 = arith.constant 0 : index
      %67 = vector.load %arg5[%c0_32, %c0_33, %c0_34, %c0_35, %c0_36] : memref<1x2x8x8x128xf32, #tpu.memory_space<vmem>>, vector<1x2x8x8x128xf32>
      %68 = vector.shape_cast %67 : vector<1x2x8x8x128xf32> to vector<2x8x8x128xf32>
      %69 = vector.shape_cast %66 : vector<2x8x8x128xf32> to vector<1x2x8x8x128xf32>
      tpu.vector_store %arg5[%c0_32, %c0_33, %c0_34, %c0_35, %c0_36], %69 {strides = array<i32>} : memref<1x2x8x8x128xf32, #tpu.memory_space<vmem>>, vector<1x2x8x8x128xf32>,
    } else {
    }
    %c0_i32_29 = arith.constant 0 : i32
    %57 = arith.cmpi ne, %arg0, %c0_i32_29 : i32
    %58 = arith.andi %49, %57 : i1
    %59 = arith.extui %58 : i1 to i32
    %c0_i32_30 = arith.constant 0 : i32
    %60 = arith.cmpi ne, %59, %c0_i32_30 : i32
    scf.if %60 {
      %61 = vector.shape_cast %48 : vector<128x128xf32> to vector<2x8x8x128xf32>
      %c0_31 = arith.constant 0 : index
      %c0_32 = arith.constant 0 : index
      %c0_33 = arith.constant 0 : index
      %c0_34 = arith.constant 0 : index
      %c0_35 = arith.constant 0 : index
      %62 = vector.load %arg5[%c0_31, %c0_32, %c0_33, %c0_34, %c0_35] : memref<1x2x8x8x128xf32, #tpu.memory_space<vmem>>, vector<1x2x8x8x128xf32>
      %63 = vector.shape_cast %62 : vector<1x2x8x8x128xf32> to vector<2x8x8x128xf32>
      %64 = vector.shape_cast %61 : vector<2x8x8x128xf32> to vector<1x2x8x8x128xf32>
      tpu.vector_store %arg5[%c0_31, %c0_32, %c0_33, %c0_34, %c0_35], %64 {strides = array<i32>} : memref<1x2x8x8x128xf32, #tpu.memory_space<vmem>>, vector<1x2x8x8x128xf32>,
    } else {
    }
    return
  }
  func.func @transform_0(%arg0: i32, %arg1: i32) -> (i32, i32, i32, i32) {
    %c0_i32 = arith.constant 0 : i32
    %c0_i32_0 = arith.constant 0 : i32
    %c0_i32_1 = arith.constant 0 : i32
    %c0_i32_2 = arith.constant 0 : i32
    %c0_i32_3 = arith.constant 0 : i32
    return %c0_i32, %c0_i32_0, %c0_i32_1, %c0_i32_2 : i32, i32, i32, i32
  }
  func.func @transform_1(%arg0: i32, %arg1: i32) -> (i32, i32, i32, i32) {
    %c0_i32 = arith.constant 0 : i32
    %c0_i32_0 = arith.constant 0 : i32
    %c0_i32_1 = arith.constant 0 : i32
    return %arg0, %arg1, %c0_i32, %c0_i32_0 : i32, i32, i32, i32
  }
  func.func @transform_2(%arg0: i32, %arg1: i32) -> (i32, i32, i32, i32) {
    %c0_i32 = arith.constant 0 : i32
    %c0_i32_0 = arith.constant 0 : i32
    %c0_i32_1 = arith.constant 0 : i32
    return %arg0, %arg1, %c0_i32, %c0_i32_0 : i32, i32, i32, i32
  }
  func.func @transform_3(%arg0: i32, %arg1: i32) -> (i32, i32, i32, i32, i32) {
    %c0_i32 = arith.constant 0 : i32
    %c0_i32_0 = arith.constant 0 : i32
    %c0_i32_1 = arith.constant 0 : i32
    %c0_i32_2 = arith.constant 0 : i32
    %c0_i32_3 = arith.constant 0 : i32
    return %arg0, %c0_i32, %c0_i32_0, %c0_i32_1, %c0_i32_2 : i32, i32, i32, i32, i32
  }
}

</mosaic_0001>

<llo_original>
// kernel: header_forward.1
$region0: #{header_forward.1}
  #allocation0 [shape = 'u32[]', space=smem, size = 0x4, offset = 0x4, fixed_abs, tag = 'smem constant byte address 0x4 - core index']
  #allocation1 [shape = 'u32[144,128]{1,0:T(1,128)}', space=vmem, size = 0x12000, scoped, tag = 'internal scratch']
  #allocation2 [shape = 'f32[2,8,8,128]{3,2,1,0:T(8,128)}', space=vmem, size = 0x10000, scoped, tag = 'scratch operand']
  #allocation3 [shape = 'bf16[128,1152]{1,0:T(16,128)(2,1)}', space=vmem, size = 0x48000, scoped, tag = 'scratch operand']
  %s0 = inlined_call_operand.vmem [shape: f32[2,8,8,128], index: 0, kind: input, shape index: {}]
  %s1 = inlined_call_operand.vmem [shape: bf16[2,5,1152,128], index: 1, kind: input, shape index: {}]
  %s2 = inlined_call_operand.vmem [shape: f32[2,5,1,128], index: 2, kind: input, shape index: {}]
  %s3 = inlined_call_operand.vmem [shape: f32[2,2,8,8,128], index: 3, kind: output, shape index: {}]
  %s4 = sld [smem:[#allocation0]]
  $region61: #{header_forward.1} parent=0
    _
  %s6 = ssub.s32 1, %s4
  %s7 = scalar_select 0, %s6, %s4
  loop: start=0, step=1, limit=12
  $region2: #{header_forward.1} parent=0 // loop_pre_header
    _
  $region3: #{header_forward.1} parent=0 // loop_header
    %s9 = sphi 0, %s13
    %p10 = scmp.ge.s32.totalorder %s9, 12
    %s16 = sphi 0, %s28
    %s17 = sphi 0, %s24
    %s18 = sphi 0, %s16
    %s19 = sphi 0, %s17
    %s20 = sphi 0, %s18
    %s21 = sphi 0, %s19
    %s29 = sphi 0, %s29
    %s31 = sphi 0, %s29
    %s32 = sphi 0, %s31
    %s46 = sphi 0, %s32
    %s54 = sphi 0, %s56
    %s57 = sphi 0, %s54
    %s58 = sphi 0, %s57
    %s74 = sphi 0, %s58
    %s82 = sphi 0, %s84
    %s85 = sphi 0, %s82
    %s86 = sphi 0, %s85
    %s102 = sphi 0, %s86
    %s108 = sphi 0, %s110
    %s111 = sphi 0, %s108
    %s112 = sphi 0, %s111
    %s128 = sphi 0, %s112
  $region4: #{header_forward.1} parent=0 // loop_header_branch
    %12 = sbr.rel (%p10) target = $region8
  $region5: #{header_forward.1} parent=0 // loop_body
    %s14 = ssub.s32 %s9, 1
    %s15 = ssub.s32 %s9, 2
    %s22 = sadd.s32 1, %s17
    %p23 = scmp.ge.s32.totalorder %s22, 5
    %s24 = scalar_select %p23, 0, %s22
    %s25 = sadd.s32 1, %s16
    %s26 = scalar_select %p23, %s25, %s16
    %p27 = scmp.ge.s32.totalorder %s26, 2
    %s28 = scalar_select %p27, 0, %s26
    %s30 = sadd.s32 %s29, 1
    %p33 = scmp.eq.s32.totalorder %s9, 9
    %p34 = scmp.ne.s32.totalorder %s29, %s31
    %p35 = scmp.eq.s32.totalorder %s9, 0
    %p36 = por %p34, %p35
    %p37 = scmp.ne.s32.totalorder %s29, %s31
    %p38 = scmp.eq.s32.totalorder %s14, 9
    %p39 = por %p37, %p38
    %p40 = scmp.ne.s32.totalorder %s31, %s32
    %p41 = scmp.eq.s32.totalorder %s14, 0
    %p42 = por %p40, %p41
    %p43 = scmp.ne.s32.totalorder %s31, %s32
    %p44 = scmp.eq.s32.totalorder %s15, 9
    %p45 = por %p43, %p44
    %p47 = scmp.ne.s32.totalorder %s32, %s46
    %p48 = scmp.eq.s32.totalorder %s15, 0
    %p49 = por %p47, %p48
    %s50 = ssub.s32 %s16, %s28
    %s51 = ssub.s32 %s17, %s24
    %s52 = sor.u32 %s50, %s51
    %p53 = scmp.eq.s32.totalorder %s52, 0
    %s55 = sadd.s32 %s54, 1
    %s56 = scalar_select %p53, %s54, %s55
    %p59 = pneg %p53
    %p60 = scmp.eq.s32.totalorder %s9, 9
    %p61 = por %p59, %p60
    %p62 = scmp.ne.s32.totalorder %s54, %s57
    %p63 = scmp.eq.s32.totalorder %s9, 0
    %p64 = por %p62, %p63
    %p65 = scmp.ne.s32.totalorder %s54, %s57
    %p66 = scmp.eq.s32.totalorder %s14, 9
    %p67 = por %p65, %p66
    %p68 = scmp.ne.s32.totalorder %s57, %s58
    %p69 = scmp.eq.s32.totalorder %s14, 0
    %p70 = por %p68, %p69
    %p71 = scmp.ne.s32.totalorder %s57, %s58
    %p72 = scmp.eq.s32.totalorder %s15, 9
    %p73 = por %p71, %p72
    %p75 = scmp.ne.s32.totalorder %s58, %s74
    %p76 = scmp.eq.s32.totalorder %s15, 0
    %p77 = por %p75, %p76
    %s78 = ssub.s32 %s16, %s28
    %s79 = ssub.s32 %s17, %s24
    %s80 = sor.u32 %s78, %s79
    %p81 = scmp.eq.s32.totalorder %s80, 0
    %s83 = sadd.s32 %s82, 1
    %s84 = scalar_select %p81, %s82, %s83
    %p87 = pneg %p81
    %p88 = scmp.eq.s32.totalorder %s9, 9
    %p89 = por %p87, %p88
    %p90 = scmp.ne.s32.totalorder %s82, %s85
    %p91 = scmp.eq.s32.totalorder %s9, 0
    %p92 = por %p90, %p91
    %p93 = scmp.ne.s32.totalorder %s82, %s85
    %p94 = scmp.eq.s32.totalorder %s14, 9
    %p95 = por %p93, %p94
    %p96 = scmp.ne.s32.totalorder %s85, %s86
    %p97 = scmp.eq.s32.totalorder %s14, 0
    %p98 = por %p96, %p97
    %p99 = scmp.ne.s32.totalorder %s85, %s86
    %p100 = scmp.eq.s32.totalorder %s15, 9
    %p101 = por %p99, %p100
    %p103 = scmp.ne.s32.totalorder %s86, %s102
    %p104 = scmp.eq.s32.totalorder %s15, 0
    %p105 = por %p103, %p104
    %s106 = ssub.s32 %s16, %s28
    %p107 = scmp.eq.s32.totalorder %s106, 0
    %s109 = sadd.s32 %s108, 1
    %s110 = scalar_select %p107, %s108, %s109
    %p113 = pneg %p107
    %p114 = scmp.eq.s32.totalorder %s9, 9
    %p115 = por %p113, %p114
    %p116 = scmp.ne.s32.totalorder %s108, %s111
    %p117 = scmp.eq.s32.totalorder %s9, 0
    %p118 = por %p116, %p117
    %p119 = scmp.ne.s32.totalorder %s108, %s111
    %p120 = scmp.eq.s32.totalorder %s14, 9
    %p121 = por %p119, %p120
    %p122 = scmp.ne.s32.totalorder %s111, %s112
    %p123 = scmp.eq.s32.totalorder %s14, 0
    %p124 = por %p122, %p123
    %p125 = scmp.ne.s32.totalorder %s111, %s112
    %p126 = scmp.eq.s32.totalorder %s15, 9
    %p127 = por %p125, %p126
    %p129 = scmp.ne.s32.totalorder %s112, %s128
    %p130 = scmp.eq.s32.totalorder %s15, 0
    %p131 = por %p129, %p130
    %p132 = scmp.le.s32.totalorder 1, %s9
    %p133 = scmp.lt.s32.totalorder %s9, 11
    %p134 = pnand %p132, %p133
    %p135 = pneg %p134
    // Predicated region
    $region9: #{header_forward.1} parent=5 // pred_check
      _
    $region10: #{header_forward.1} parent=5 // pred_check_branch
      %137 = sbr.rel (%p134) target = $region12
    $region11: #{header_forward.1} parent=5 // pred_region
      %s138 = ssub.s32 %s9, 1
      // Predicated region
      $region13: #{header_forward.1} parent=11 // pred_check
        %p139 = pneg %p42
      $region14: #{header_forward.1} parent=11 // pred_check_branch
        %141 = sbr.rel (%p139) target = $region16
      $region15: #{header_forward.1} parent=11 // pred_region
        _
      $region16: #{header_forward.1} parent=11 // pred_fallthru
        _
    $region12: #{header_forward.1} parent=5 // pred_fallthru
      _
    %p142 = scmp.lt.s32.totalorder %s9, 10
    // Predicated region
    $region17: #{header_forward.1} parent=5 // pred_check
      %p143 = pneg %p142
    $region18: #{header_forward.1} parent=5 // pred_check_branch
      %145 = sbr.rel (%p143) target = $region20
    $region19: #{header_forward.1} parent=5 // pred_region
      // Predicated region
      $region21: #{header_forward.1} parent=19 // pred_check
        %p146 = pneg %p64
      $region22: #{header_forward.1} parent=19 // pred_check_branch
        %148 = sbr.rel (%p146) target = $region24
      $region23: #{header_forward.1} parent=19 // pred_region
        %p149 = scmp.lt.s32.totalorder %s16, 1
        %s150 = scalar_select %p149, %s16, 1
        %p151 = scmp.lt.s32.totalorder %s17, 4
        %s152 = scalar_select %p151, %s17, 4
        %s153 = smul.addr %s152, 144
        %s154 = smul.addr %s150, 720
        %s155 = sadd.s32 %s153, %s154
        %s156 = smul.addr %s155, 4
        %s157 = scalar_lea.vmem %s1, %s156
      $region24: #{header_forward.1} parent=19 // pred_fallthru
        _
      // Predicated region
      $region25: #{header_forward.1} parent=19 // pred_check
        %p158 = pneg %p92
      $region26: #{header_forward.1} parent=19 // pred_check_branch
        %160 = sbr.rel (%p158) target = $region28
      $region27: #{header_forward.1} parent=19 // pred_region
        %p161 = scmp.lt.s32.totalorder %s16, 1
        %s162 = scalar_select %p161, %s16, 1
        %p163 = scmp.lt.s32.totalorder %s17, 4
        %s164 = scalar_select %p163, %s17, 4
        %s165 = smul.addr %s162, 5
        %s166 = sadd.s32 %s164, %s165
        %s167 = scalar_lea.vmem %s2, %s166
      $region28: #{header_forward.1} parent=19 // pred_fallthru
        _
    $region20: #{header_forward.1} parent=5 // pred_fallthru
      _
    %p168 = scmp.le.s32.totalorder 1, %s9
    %p169 = scmp.lt.s32.totalorder %s9, 11
    %p170 = pnand %p168, %p169
    %p171 = pneg %p170
    // Predicated region
    $region29: #{header_forward.1} parent=5 // pred_check
      _
    $region30: #{header_forward.1} parent=5 // pred_check_branch
      %173 = sbr.rel (%p170) target = $region32
    $region31: #{header_forward.1} parent=5 // pred_region
      %s174 = ssub.s32 %s9, 1
      %p175 = pneg %p42
      %p176 = pneg %p39
      %p177 = scmp.lt.s32.totalorder %s18, 1
      %s178 = scalar_select %p177, %s18, 1
      %p179 = scmp.lt.s32.totalorder %s19, 4
      %s180 = scalar_select %p179, %s19, 4
      %s181 = smul.addr %s180, 144
      %s182 = smul.addr %s178, 720
      %s183 = sadd.s32 %s181, %s182
      %s184 = smul.addr %s183, 4
      %s185 = scalar_lea.vmem %s1, %s184
      %p186 = pneg %p70
      %p187 = pneg %p67
      %p188 = scmp.lt.s32.totalorder %s18, 1
      %s189 = scalar_select %p188, %s18, 1
      %p190 = scmp.lt.s32.totalorder %s19, 4
      %s191 = scalar_select %p190, %s19, 4
      %s192 = smul.addr %s189, 5
      %s193 = sadd.s32 %s191, %s192
      %s194 = scalar_lea.vmem %s2, %s193
      %p195 = pneg %p98
      %p196 = pneg %p95
      %p197 = pneg %p124
      %p198 = pneg %p121
      %p199 = scmp.lt.s32.totalorder %s18, 1
      %s200 = scalar_select %p199, %s18, 1
      %s201 = smul.addr %s200, 16
      %s202 = smul.addr %s201, 8
      %s203 = scalar_lea.vmem %s3, %s202
      %p204 = scmp.lt.s32.totalorder %s18, 1
      %s205 = scalar_select %p204, %s18, 1
      %p206 = scmp.lt.s32.totalorder %s19, 4
      %s207 = scalar_select %p206, %s19, 4
      %s208 = smul.addr %s207, 144
      %s209 = smul.addr %s205, 720
      %s210 = sadd.s32 %s208, %s209
      %s211 = smul.addr %s210, 4
      %s212 = scalar_lea.vmem %s1, %s211
      %p213 = scmp.lt.s32.totalorder %s18, 1
      %s214 = scalar_select %p213, %s18, 1
      %p215 = scmp.lt.s32.totalorder %s19, 4
      %s216 = scalar_select %p215, %s19, 4
      %s217 = smul.addr %s214, 5
      %s218 = sadd.s32 %s216, %s217
      %s219 = scalar_lea.vmem %s2, %s218
      %p220 = scmp.lt.s32.totalorder %s18, 1
      %s221 = scalar_select %p220, %s18, 1
      %s222 = smul.addr %s221, 16
      %s223 = smul.addr %s222, 8
      %s224 = scalar_lea.vmem %s3, %s223
      %p226 = scmp.eq.s32.totalorder %s19, 0
      // Predicated region
      $region33: #{header_forward.1} parent=31 // pred_check
        %p227 = pneg %p226
      $region34: #{header_forward.1} parent=31 // pred_check_branch
        %229 = sbr.rel (%p227) target = $region36
      $region35: #{header_forward.1} parent=31 // pred_region
        %v230 = vld [vmem:[%s0] sm:$0xff]
        %v231 = vld [vmem:[%s0 + $0x8] sm:$0xff]
        %v232 = vld [vmem:[%s0 + $0x10] sm:$0xff]
        %v233 = vld [vmem:[%s0 + $0x18] sm:$0xff]
        %v234 = vld [vmem:[%s0 + $0x20] sm:$0xff]
        %v235 = vld [vmem:[%s0 + $0x28] sm:$0xff]
        %v236 = vld [vmem:[%s0 + $0x30] sm:$0xff]
        %v237 = vld [vmem:[%s0 + $0x38] sm:$0xff]
        %v238 = vld [vmem:[%s0 + $0x40] sm:$0xff]
        %v239 = vld [vmem:[%s0 + $0x48] sm:$0xff]
        %v240 = vld [vmem:[%s0 + $0x50] sm:$0xff]
        %v241 = vld [vmem:[%s0 + $0x58] sm:$0xff]
        %v242 = vld [vmem:[%s0 + $0x60] sm:$0xff]
        %v243 = vld [vmem:[%s0 + $0x68] sm:$0xff]
        %v244 = vld [vmem:[%s0 + $0x70] sm:$0xff]
        %v245 = vld [vmem:[%s0 + $0x78] sm:$0xff]
        %246 = vst [vmem:[#allocation2] sm:$0xff] %v230
        %247 = vst [vmem:[#allocation2 + $0x8] sm:$0xff] %v231
        %248 = vst [vmem:[#allocation2 + $0x10] sm:$0xff] %v232
        %249 = vst [vmem:[#allocation2 + $0x18] sm:$0xff] %v233
        %250 = vst [vmem:[#allocation2 + $0x20] sm:$0xff] %v234
        %251 = vst [vmem:[#allocation2 + $0x28] sm:$0xff] %v235
        %252 = vst [vmem:[#allocation2 + $0x30] sm:$0xff] %v236
        %253 = vst [vmem:[#allocation2 + $0x38] sm:$0xff] %v237
        %254 = vst [vmem:[#allocation2 + $0x40] sm:$0xff] %v238
        %255 = vst [vmem:[#allocation2 + $0x48] sm:$0xff] %v239
        %256 = vst [vmem:[#allocation2 + $0x50] sm:$0xff] %v240
        %257 = vst [vmem:[#allocation2 + $0x58] sm:$0xff] %v241
        %258 = vst [vmem:[#allocation2 + $0x60] sm:$0xff] %v242
        %259 = vst [vmem:[#allocation2 + $0x68] sm:$0xff] %v243
        %260 = vst [vmem:[#allocation2 + $0x70] sm:$0xff] %v244
        %261 = vst [vmem:[#allocation2 + $0x78] sm:$0xff] %v245
      $region36: #{header_forward.1} parent=31 // pred_fallthru
        _
      %v262 = vld [vmem:[#allocation2] sm:$0xff]
      %v263 = vld [vmem:[#allocation2 + $0x8] sm:$0xff]
      %v264 = vld [vmem:[#allocation2 + $0x10] sm:$0xff]
      %v265 = vld [vmem:[#allocation2 + $0x18] sm:$0xff]
      %v266 = vld [vmem:[#allocation2 + $0x20] sm:$0xff]
      %v267 = vld [vmem:[#allocation2 + $0x28] sm:$0xff]
      %v268 = vld [vmem:[#allocation2 + $0x30] sm:$0xff]
      %v269 = vld [vmem:[#allocation2 + $0x38] sm:$0xff]
      %v270 = vld [vmem:[#allocation2 + $0x40] sm:$0xff]
      %v271 = vld [vmem:[#allocation2 + $0x48] sm:$0xff]
      %v272 = vld [vmem:[#allocation2 + $0x50] sm:$0xff]
      %v273 = vld [vmem:[#allocation2 + $0x58] sm:$0xff]
      %v274 = vld [vmem:[#allocation2 + $0x60] sm:$0xff]
      %v275 = vld [vmem:[#allocation2 + $0x68] sm:$0xff]
      %v276 = vld [vmem:[#allocation2 + $0x70] sm:$0xff]
      %v277 = vld [vmem:[#allocation2 + $0x78] sm:$0xff]
      %v278 = vpack.c.bf16 %v262, %v262
      %v279 = vpack.c.bf16 %v263, %v263
      %v280 = vpack.c.bf16 %v264, %v264
      %v281 = vpack.c.bf16 %v265, %v265
      %v282 = vpack.c.bf16 %v266, %v266
      %v283 = vpack.c.bf16 %v267, %v267
      %v284 = vpack.c.bf16 %v268, %v268
      %v285 = vpack.c.bf16 %v269, %v269
      %v286 = vpack.c.bf16 %v270, %v270
      %v287 = vpack.c.bf16 %v271, %v271
      %v288 = vpack.c.bf16 %v272, %v272
      %v289 = vpack.c.bf16 %v273, %v273
      %v290 = vpack.c.bf16 %v274, %v274
      %v291 = vpack.c.bf16 %v275, %v275
      %v292 = vpack.c.bf16 %v276, %v276
      %v293 = vpack.c.bf16 %v277, %v277
      %v295 = vshrl.u32 %v278, 16
      %v297 = vrot.slane %v295, 7
      %v298 = vshll.u32 %v278, 16
      %v300 = vor.u32 %v297, %v298
      %v302 = vshrl.u32 %v279, 16
      %v304 = vrot.slane %v302, 7
      %v305 = vshll.u32 %v279, 16
      %v307 = vor.u32 %v304, %v305
      %v309 = vshrl.u32 %v280, 16
      %v311 = vrot.slane %v309, 7
      %v312 = vshll.u32 %v280, 16
      %v314 = vor.u32 %v311, %v312
      %v316 = vshrl.u32 %v281, 16
      %v318 = vrot.slane %v316, 7
      %v319 = vshll.u32 %v281, 16
      %v321 = vor.u32 %v318, %v319
      %v323 = vshrl.u32 %v282, 16
      %v325 = vrot.slane %v323, 7
      %v326 = vshll.u32 %v282, 16
      %v328 = vor.u32 %v325, %v326
      %v330 = vshrl.u32 %v283, 16
      %v332 = vrot.slane %v330, 7
      %v333 = vshll.u32 %v283, 16
      %v335 = vor.u32 %v332, %v333
      %v337 = vshrl.u32 %v284, 16
      %v339 = vrot.slane %v337, 7
      %v340 = vshll.u32 %v284, 16
      %v342 = vor.u32 %v339, %v340
      %v344 = vshrl.u32 %v285, 16
      %v346 = vrot.slane %v344, 7
      %v347 = vshll.u32 %v285, 16
      %v349 = vor.u32 %v346, %v347
      %v351 = vshrl.u32 %v286, 16
      %v353 = vrot.slane %v351, 7
      %v354 = vshll.u32 %v286, 16
      %v356 = vor.u32 %v353, %v354
      %v358 = vshrl.u32 %v287, 16
      %v360 = vrot.slane %v358, 7
      %v361 = vshll.u32 %v287, 16
      %v363 = vor.u32 %v360, %v361
      %v365 = vshrl.u32 %v288, 16
      %v367 = vrot.slane %v365, 7
      %v368 = vshll.u32 %v288, 16
      %v370 = vor.u32 %v367, %v368
      %v372 = vshrl.u32 %v289, 16
      %v374 = vrot.slane %v372, 7
      %v375 = vshll.u32 %v289, 16
      %v377 = vor.u32 %v374, %v375
      %v379 = vshrl.u32 %v290, 16
      %v381 = vrot.slane %v379, 7
      %v382 = vshll.u32 %v290, 16
      %v384 = vor.u32 %v381, %v382
      %v386 = vshrl.u32 %v291, 16
      %v388 = vrot.slane %v386, 7
      %v389 = vshll.u32 %v291, 16
      %v391 = vor.u32 %v388, %v389
      %v393 = vshrl.u32 %v292, 16
      %v395 = vrot.slane %v393, 7
      %v396 = vshll.u32 %v292, 16
      %v398 = vor.u32 %v395, %v396
      %v400 = vshrl.u32 %v293, 16
      %v402 = vrot.slane %v400, 7
      %v403 = vshll.u32 %v293, 16
      %v405 = vor.u32 %v402, %v403
      %vm422 = vcmask 1040384
      %vm423 = vsmask.f32 256
      %vm424 = vmand %vm422, %vm423
      %v425 = vsel %vm424, 0, %v300
      %v426 = vsel %vm424, 0, %v307
      %v427 = vsel %vm424, 0, %v314
      %v428 = vsel %vm424, 0, %v321
      %v429 = vsel %vm424, 0, %v328
      %v430 = vsel %vm424, 0, %v335
      %v431 = vsel %vm424, 0, %v342
      %v432 = vsel %vm424, 0, %v349
      %v433 = vsel %vm424, 0, %v356
      %v434 = vsel %vm424, 0, %v363
      %v435 = vsel %vm424, 0, %v370
      %v436 = vsel %vm424, 0, %v377
      %v437 = vsel %vm424, 0, %v384
      %v438 = vsel %vm424, 0, %v391
      %v439 = vsel %vm424, 0, %v398
      %v440 = vsel %vm424, 0, %v405
      %v456 = vunpack.c.l.b16 0
      %v457 = vunpack.c.l.b16 %v425
      %v458 = vunpack.c.l.b16 %v426
      %v459 = vunpack.c.l.b16 %v427
      %v460 = vunpack.c.l.b16 %v428
      %v461 = vunpack.c.l.b16 %v429
      %v462 = vunpack.c.l.b16 %v430
      %v463 = vunpack.c.l.b16 %v431
      %v464 = vunpack.c.l.b16 %v433
      %v465 = vunpack.c.l.b16 %v434
      %v466 = vunpack.c.l.b16 %v435
      %v467 = vunpack.c.l.b16 %v436
      %v468 = vunpack.c.l.b16 %v437
      %v469 = vunpack.c.l.b16 %v438
      %v470 = vunpack.c.l.b16 %v439
      %v471 = vpack.c.b16 %v457, %v456
      %v472 = vpack.c.b16 %v459, %v458
      %v473 = vpack.c.b16 %v461, %v460
      %v474 = vpack.c.b16 %v463, %v462
      %v475 = vpack.c.b16 %v464, %v456
      %v476 = vpack.c.b16 %v466, %v465
      %v477 = vpack.c.b16 %v468, %v467
      %v478 = vpack.c.b16 %v470, %v469
      %487 = vst [vmem:[#allocation3] sm:$0xff] %v471
      %488 = vst [vmem:[#allocation3 + $0x48] sm:$0xff] %v472
      %489 = vst [vmem:[#allocation3 + $0x90] sm:$0xff] %v473
      %490 = vst [vmem:[#allocation3 + $0xd8] sm:$0xff] %v474
      %491 = vst [vmem:[#allocation3 + $0x120] sm:$0xff] %v475
      %492 = vst [vmem:[#allocation3 + $0x168] sm:$0xff] %v476
      %493 = vst [vmem:[#allocation3 + $0x1b0] sm:$0xff] %v477
      %494 = vst [vmem:[#allocation3 + $0x1f8] sm:$0xff] %v478
      %v497 = vunpack.c.l.b16 %v432
      %v498 = vunpack.c.l.b16 %v440
      %v499 = vpack.c.b16 %v458, %v457
      %v500 = vpack.c.b16 %v460, %v459
      %v501 = vpack.c.b16 %v462, %v461
      %v502 = vpack.c.b16 %v497, %v463
      %v503 = vpack.c.b16 %v465, %v464
      %v504 = vpack.c.b16 %v467, %v466
      %v505 = vpack.c.b16 %v469, %v468
      %v506 = vpack.c.b16 %v498, %v470
      %515 = vst [vmem:[#allocation3 + $0x18] sm:$0xff] %v499
      %516 = vst [vmem:[#allocation3 + $0x60] sm:$0xff] %v500
      %517 = vst [vmem:[#allocation3 + $0xa8] sm:$0xff] %v501
      %518 = vst [vmem:[#allocation3 + $0xf0] sm:$0xff] %v502
      %519 = vst [vmem:[#allocation3 + $0x138] sm:$0xff] %v503
      %520 = vst [vmem:[#allocation3 + $0x180] sm:$0xff] %v504
      %521 = vst [vmem:[#allocation3 + $0x1c8] sm:$0xff] %v505
      %522 = vst [vmem:[#allocation3 + $0x210] sm:$0xff] %v506
      %v523 = vpack.c.b16 %v456, %v497
      %v524 = vpack.c.b16 %v456, %v498
      %527 = vst [vmem:[#allocation3 + $0x30] sm:$0xff] %v472
      %528 = vst [vmem:[#allocation3 + $0x78] sm:$0xff] %v473
      %529 = vst [vmem:[#allocation3 + $0xc0] sm:$0xff] %v474
      %530 = vst [vmem:[#allocation3 + $0x108] sm:$0xff] %v523
      %531 = vst [vmem:[#allocation3 + $0x150] sm:$0xff] %v476
      %532 = vst [vmem:[#allocation3 + $0x198] sm:$0xff] %v477
      %533 = vst [vmem:[#allocation3 + $0x1e0] sm:$0xff] %v478
      %534 = vst [vmem:[#allocation3 + $0x228] sm:$0xff] %v524
      %v549 = vunpack.c.l.b16 %v278
      %v550 = vunpack.c.l.b16 %v279
      %v551 = vunpack.c.l.b16 %v280
      %v552 = vunpack.c.l.b16 %v281
      %v553 = vunpack.c.l.b16 %v282
      %v554 = vunpack.c.l.b16 %v283
      %v555 = vunpack.c.l.b16 %v284
      %v556 = vunpack.c.l.b16 %v286
      %v557 = vunpack.c.l.b16 %v287
      %v558 = vunpack.c.l.b16 %v288
      %v559 = vunpack.c.l.b16 %v289
      %v560 = vunpack.c.l.b16 %v290
      %v561 = vunpack.c.l.b16 %v291
      %v562 = vunpack.c.l.b16 %v292
      %v563 = vpack.c.b16 %v549, %v456
      %v564 = vpack.c.b16 %v551, %v550
      %v565 = vpack.c.b16 %v553, %v552
      %v566 = vpack.c.b16 %v555, %v554
      %v567 = vpack.c.b16 %v556, %v456
      %v568 = vpack.c.b16 %v558, %v557
      %v569 = vpack.c.b16 %v560, %v559
      %v570 = vpack.c.b16 %v562, %v561
      %579 = vst [vmem:[#allocation3 + $0x8] sm:$0xff] %v563
      %580 = vst [vmem:[#allocation3 + $0x50] sm:$0xff] %v564
      %581 = vst [vmem:[#allocation3 + $0x98] sm:$0xff] %v565
      %582 = vst [vmem:[#allocation3 + $0xe0] sm:$0xff] %v566
      %583 = vst [vmem:[#allocation3 + $0x128] sm:$0xff] %v567
      %584 = vst [vmem:[#allocation3 + $0x170] sm:$0xff] %v568
      %585 = vst [vmem:[#allocation3 + $0x1b8] sm:$0xff] %v569
      %586 = vst [vmem:[#allocation3 + $0x200] sm:$0xff] %v570
      %v589 = vunpack.c.l.b16 %v285
      %v590 = vunpack.c.l.b16 %v293
      %v591 = vpack.c.b16 %v550, %v549
      %v592 = vpack.c.b16 %v552, %v551
      %v593 = vpack.c.b16 %v554, %v553
      %v594 = vpack.c.b16 %v589, %v555
      %v595 = vpack.c.b16 %v557, %v556
      %v596 = vpack.c.b16 %v559, %v558
      %v597 = vpack.c.b16 %v561, %v560
      %v598 = vpack.c.b16 %v590, %v562
      %607 = vst [vmem:[#allocation3 + $0x20] sm:$0xff] %v591
      %608 = vst [vmem:[#allocation3 + $0x68] sm:$0xff] %v592
      %609 = vst [vmem:[#allocation3 + $0xb0] sm:$0xff] %v593
      %610 = vst [vmem:[#allocation3 + $0xf8] sm:$0xff] %v594
      %611 = vst [vmem:[#allocation3 + $0x140] sm:$0xff] %v595
      %612 = vst [vmem:[#allocation3 + $0x188] sm:$0xff] %v596
      %613 = vst [vmem:[#allocation3 + $0x1d0] sm:$0xff] %v597
      %614 = vst [vmem:[#allocation3 + $0x218] sm:$0xff] %v598
      %v615 = vpack.c.b16 %v456, %v589
      %v616 = vpack.c.b16 %v456, %v590
      %619 = vst [vmem:[#allocation3 + $0x38] sm:$0xff] %v564
      %620 = vst [vmem:[#allocation3 + $0x80] sm:$0xff] %v565
      %621 = vst [vmem:[#allocation3 + $0xc8] sm:$0xff] %v566
      %622 = vst [vmem:[#allocation3 + $0x110] sm:$0xff] %v615
      %623 = vst [vmem:[#allocation3 + $0x158] sm:$0xff] %v568
      %624 = vst [vmem:[#allocation3 + $0x1a0] sm:$0xff] %v569
      %625 = vst [vmem:[#allocation3 + $0x1e8] sm:$0xff] %v570
      %626 = vst [vmem:[#allocation3 + $0x230] sm:$0xff] %v616
      %v627 = vrot.slane %v298, 1
      %v628 = vor.u32 %v295, %v627
      %v629 = vrot.slane %v305, 1
      %v630 = vor.u32 %v302, %v629
      %v631 = vrot.slane %v312, 1
      %v632 = vor.u32 %v309, %v631
      %v633 = vrot.slane %v319, 1
      %v634 = vor.u32 %v316, %v633
      %v635 = vrot.slane %v326, 1
      %v636 = vor.u32 %v323, %v635
      %v637 = vrot.slane %v333, 1
      %v638 = vor.u32 %v330, %v637
      %v639 = vrot.slane %v340, 1
      %v640 = vor.u32 %v337, %v639
      %v641 = vrot.slane %v347, 1
      %v642 = vor.u32 %v344, %v641
      %v643 = vrot.slane %v354, 1
      %v644 = vor.u32 %v351, %v643
      %v645 = vrot.slane %v361, 1
      %v646 = vor.u32 %v358, %v645
      %v647 = vrot.slane %v368, 1
      %v648 = vor.u32 %v365, %v647
      %v649 = vrot.slane %v375, 1
      %v650 = vor.u32 %v372, %v649
      %v651 = vrot.slane %v382, 1
      %v652 = vor.u32 %v379, %v651
      %v653 = vrot.slane %v389, 1
      %v654 = vor.u32 %v386, %v653
      %v655 = vrot.slane %v396, 1
      %v656 = vor.u32 %v393, %v655
      %v657 = vrot.slane %v403, 1
      %v658 = vor.u32 %v400, %v657
      %vm675 = vcmask 1043456
      %vm676 = vsmask.f32 3328
      %vm677 = vmand %vm675, %vm676
      %v678 = vsel %vm677, %v628, 0
      %v679 = vsel %vm677, %v630, 0
      %v680 = vsel %vm677, %v632, 0
      %v681 = vsel %vm677, %v634, 0
      %v682 = vsel %vm677, %v636, 0
      %v683 = vsel %vm677, %v638, 0
      %v684 = vsel %vm677, %v640, 0
      %v685 = vsel %vm677, %v642, 0
      %v686 = vsel %vm677, %v644, 0
      %v687 = vsel %vm677, %v646, 0
      %v688 = vsel %vm677, %v648, 0
      %v689 = vsel %vm677, %v650, 0
      %v690 = vsel %vm677, %v652, 0
      %v691 = vsel %vm677, %v654, 0
      %v692 = vsel %vm677, %v656, 0
      %v693 = vsel %vm677, %v658, 0
      %v708 = vunpack.c.l.b16 %v678
      %v709 = vunpack.c.l.b16 %v679
      %v710 = vunpack.c.l.b16 %v680
      %v711 = vunpack.c.l.b16 %v681
      %v712 = vunpack.c.l.b16 %v682
      %v713 = vunpack.c.l.b16 %v683
      %v714 = vunpack.c.l.b16 %v684
      %v715 = vunpack.c.l.b16 %v686
      %v716 = vunpack.c.l.b16 %v687
      %v717 = vunpack.c.l.b16 %v688
      %v718 = vunpack.c.l.b16 %v689
      %v719 = vunpack.c.l.b16 %v690
      %v720 = vunpack.c.l.b16 %v691
      %v721 = vunpack.c.l.b16 %v692
      %v722 = vpack.c.b16 %v708, %v456
      %v723 = vpack.c.b16 %v710, %v709
      %v724 = vpack.c.b16 %v712, %v711
      %v725 = vpack.c.b16 %v714, %v713
      %v726 = vpack.c.b16 %v715, %v456
      %v727 = vpack.c.b16 %v717, %v716
      %v728 = vpack.c.b16 %v719, %v718
      %v729 = vpack.c.b16 %v721, %v720
      %738 = vst [vmem:[#allocation3 + $0x10] sm:$0xff] %v722
      %739 = vst [vmem:[#allocation3 + $0x58] sm:$0xff] %v723
      %740 = vst [vmem:[#allocation3 + $0xa0] sm:$0xff] %v724
      %741 = vst [vmem:[#allocation3 + $0xe8] sm:$0xff] %v725
      %742 = vst [vmem:[#allocation3 + $0x130] sm:$0xff] %v726
      %743 = vst [vmem:[#allocation3 + $0x178] sm:$0xff] %v727
      %744 = vst [vmem:[#allocation3 + $0x1c0] sm:$0xff] %v728
      %745 = vst [vmem:[#allocation3 + $0x208] sm:$0xff] %v729
      %v748 = vunpack.c.l.b16 %v685
      %v749 = vunpack.c.l.b16 %v693
      %v750 = vpack.c.b16 %v709, %v708
      %v751 = vpack.c.b16 %v711, %v710
      %v752 = vpack.c.b16 %v713, %v712
      %v753 = vpack.c.b16 %v748, %v714
      %v754 = vpack.c.b16 %v716, %v715
      %v755 = vpack.c.b16 %v718, %v717
      %v756 = vpack.c.b16 %v720, %v719
      %v757 = vpack.c.b16 %v749, %v721
      %766 = vst [vmem:[#allocation3 + $0x28] sm:$0xff] %v750
      %767 = vst [vmem:[#allocation3 + $0x70] sm:$0xff] %v751
      %768 = vst [vmem:[#allocation3 + $0xb8] sm:$0xff] %v752
      %769 = vst [vmem:[#allocation3 + $0x100] sm:$0xff] %v753
      %770 = vst [vmem:[#allocation3 + $0x148] sm:$0xff] %v754
      %771 = vst [vmem:[#allocation3 + $0x190] sm:$0xff] %v755
      %772 = vst [vmem:[#allocation3 + $0x1d8] sm:$0xff] %v756
      %773 = vst [vmem:[#allocation3 + $0x220] sm:$0xff] %v757
      %v774 = vpack.c.b16 %v456, %v748
      %v775 = vpack.c.b16 %v456, %v749
      %778 = vst [vmem:[#allocation3 + $0x40] sm:$0xff] %v723
      %779 = vst [vmem:[#allocation3 + $0x88] sm:$0xff] %v724
      %780 = vst [vmem:[#allocation3 + $0xd0] sm:$0xff] %v725
      %781 = vst [vmem:[#allocation3 + $0x118] sm:$0xff] %v774
      %782 = vst [vmem:[#allocation3 + $0x160] sm:$0xff] %v727
      %783 = vst [vmem:[#allocation3 + $0x1a8] sm:$0xff] %v728
      %784 = vst [vmem:[#allocation3 + $0x1f0] sm:$0xff] %v729
      %785 = vst [vmem:[#allocation3 + $0x238] sm:$0xff] %v775
      %v786 = vld [vmem:[#allocation3] sm:$0xff]
      %v787 = vld [vmem:[#allocation3 + $0x8] sm:$0xff]
      %v788 = vld [vmem:[#allocation3 + $0x10] sm:$0xff]
      %v789 = vld [vmem:[#allocation3 + $0x18] sm:$0xff]
      %v790 = vld [vmem:[#allocation3 + $0x20] sm:$0xff]
      %v791 = vld [vmem:[#allocation3 + $0x28] sm:$0xff]
      %v792 = vld [vmem:[#allocation3 + $0x30] sm:$0xff]
      %v793 = vld [vmem:[#allocation3 + $0x38] sm:$0xff]
      %v794 = vld [vmem:[#allocation3 + $0x40] sm:$0xff]
      %v795 = vld [vmem:[#allocation3 + $0x48] sm:$0xff]
      %v796 = vld [vmem:[#allocation3 + $0x50] sm:$0xff]
      %v797 = vld [vmem:[#allocation3 + $0x58] sm:$0xff]
      %v798 = vld [vmem:[#allocation3 + $0x60] sm:$0xff]
      %v799 = vld [vmem:[#allocation3 + $0x68] sm:$0xff]
      %v800 = vld [vmem:[#allocation3 + $0x70] sm:$0xff]
      %v801 = vld [vmem:[#allocation3 + $0x78] sm:$0xff]
      %v802 = vld [vmem:[#allocation3 + $0x80] sm:$0xff]
      %v803 = vld [vmem:[#allocation3 + $0x88] sm:$0xff]
      %v804 = vld [vmem:[#allocation3 + $0x90] sm:$0xff]
      %v805 = vld [vmem:[#allocation3 + $0x98] sm:$0xff]
      %v806 = vld [vmem:[#allocation3 + $0xa0] sm:$0xff]
      %v807 = vld [vmem:[#allocation3 + $0xa8] sm:$0xff]
      %v808 = vld [vmem:[#allocation3 + $0xb0] sm:$0xff]
      %v809 = vld [vmem:[#allocation3 + $0xb8] sm:$0xff]
      %v810 = vld [vmem:[#allocation3 + $0xc0] sm:$0xff]
      %v811 = vld [vmem:[#allocation3 + $0xc8] sm:$0xff]
      %v812 = vld [vmem:[#allocation3 + $0xd0] sm:$0xff]
      %v813 = vld [vmem:[#allocation3 + $0xd8] sm:$0xff]
      %v814 = vld [vmem:[#allocation3 + $0xe0] sm:$0xff]
      %v815 = vld [vmem:[#allocation3 + $0xe8] sm:$0xff]
      %v816 = vld [vmem:[#allocation3 + $0xf0] sm:$0xff]
      %v817 = vld [vmem:[#allocation3 + $0xf8] sm:$0xff]
      %v818 = vld [vmem:[#allocation3 + $0x100] sm:$0xff]
      %v819 = vld [vmem:[#allocation3 + $0x108] sm:$0xff]
      %v820 = vld [vmem:[#allocation3 + $0x110] sm:$0xff]
      %v821 = vld [vmem:[#allocation3 + $0x118] sm:$0xff]
      %v822 = vld [vmem:[#allocation3 + $0x120] sm:$0xff]
      %v823 = vld [vmem:[#allocation3 + $0x128] sm:$0xff]
      %v824 = vld [vmem:[#allocation3 + $0x130] sm:$0xff]
      %v825 = vld [vmem:[#allocation3 + $0x138] sm:$0xff]
      %v826 = vld [vmem:[#allocation3 + $0x140] sm:$0xff]
      %v827 = vld [vmem:[#allocation3 + $0x148] sm:$0xff]
      %v828 = vld [vmem:[#allocation3 + $0x150] sm:$0xff]
      %v829 = vld [vmem:[#allocation3 + $0x158] sm:$0xff]
      %v830 = vld [vmem:[#allocation3 + $0x160] sm:$0xff]
      %v831 = vld [vmem:[#allocation3 + $0x168] sm:$0xff]
      %v832 = vld [vmem:[#allocation3 + $0x170] sm:$0xff]
      %v833 = vld [vmem:[#allocation3 + $0x178] sm:$0xff]
      %v834 = vld [vmem:[#allocation3 + $0x180] sm:$0xff]
      %v835 = vld [vmem:[#allocation3 + $0x188] sm:$0xff]
      %v836 = vld [vmem:[#allocation3 + $0x190] sm:$0xff]
      %v837 = vld [vmem:[#allocation3 + $0x198] sm:$0xff]
      %v838 = vld [vmem:[#allocation3 + $0x1a0] sm:$0xff]
      %v839 = vld [vmem:[#allocation3 + $0x1a8] sm:$0xff]
      %v840 = vld [vmem:[#allocation3 + $0x1b0] sm:$0xff]
      %v841 = vld [vmem:[#allocation3 + $0x1b8] sm:$0xff]
      %v842 = vld [vmem:[#allocation3 + $0x1c0] sm:$0xff]
      %v843 = vld [vmem:[#allocation3 + $0x1c8] sm:$0xff]
      %v844 = vld [vmem:[#allocation3 + $0x1d0] sm:$0xff]
      %v845 = vld [vmem:[#allocation3 + $0x1d8] sm:$0xff]
      %v846 = vld [vmem:[#allocation3 + $0x1e0] sm:$0xff]
      %v847 = vld [vmem:[#allocation3 + $0x1e8] sm:$0xff]
      %v848 = vld [vmem:[#allocation3 + $0x1f0] sm:$0xff]
      %v849 = vld [vmem:[#allocation3 + $0x1f8] sm:$0xff]
      %v850 = vld [vmem:[#allocation3 + $0x200] sm:$0xff]
      %v851 = vld [vmem:[#allocation3 + $0x208] sm:$0xff]
      %v852 = vld [vmem:[#allocation3 + $0x210] sm:$0xff]
      %v853 = vld [vmem:[#allocation3 + $0x218] sm:$0xff]
      %v854 = vld [vmem:[#allocation3 + $0x220] sm:$0xff]
      %v855 = vld [vmem:[#allocation3 + $0x228] sm:$0xff]
      %v856 = vld [vmem:[#allocation3 + $0x230] sm:$0xff]
      %v857 = vld [vmem:[#allocation3 + $0x238] sm:$0xff]
      %v858 = vld [vmem:[%s212] sm:$0xf]
      %v859 = vld [vmem:[%s212 + $0x4] sm:$0xf]
      %v860 = vld [vmem:[%s212 + $0x8] sm:$0xf]
      %v861 = vld [vmem:[%s212 + $0xc] sm:$0xf]
      %v862 = vld [vmem:[%s212 + $0x10] sm:$0xf]
      %v863 = vld [vmem:[%s212 + $0x14] sm:$0xf]
      %v864 = vld [vmem:[%s212 + $0x18] sm:$0xf]
      %v865 = vld [vmem:[%s212 + $0x1c] sm:$0xf]
      %v866 = vld [vmem:[%s212 + $0x20] sm:$0xf]
      %v867 = vld [vmem:[%s212 + $0x24] sm:$0xf]
      %v868 = vld [vmem:[%s212 + $0x28] sm:$0xf]
      %v869 = vld [vmem:[%s212 + $0x2c] sm:$0xf]
      %v870 = vld [vmem:[%s212 + $0x30] sm:$0xf]
      %v871 = vld [vmem:[%s212 + $0x34] sm:$0xf]
      %v872 = vld [vmem:[%s212 + $0x38] sm:$0xf]
      %v873 = vld [vmem:[%s212 + $0x3c] sm:$0xf]
      %v874 = vld [vmem:[%s212 + $0x40] sm:$0xf]
      %v875 = vld [vmem:[%s212 + $0x44] sm:$0xf]
      %v876 = vld [vmem:[%s212 + $0x48] sm:$0xf]
      %v877 = vld [vmem:[%s212 + $0x4c] sm:$0xf]
      %v878 = vld [vmem:[%s212 + $0x50] sm:$0xf]
      %v879 = vld [vmem:[%s212 + $0x54] sm:$0xf]
      %v880 = vld [vmem:[%s212 + $0x58] sm:$0xf]
      %v881 = vld [vmem:[%s212 + $0x5c] sm:$0xf]
      %v882 = vld [vmem:[%s212 + $0x60] sm:$0xf]
      %v883 = vld [vmem:[%s212 + $0x64] sm:$0xf]
      %v884 = vld [vmem:[%s212 + $0x68] sm:$0xf]
      %v885 = vld [vmem:[%s212 + $0x6c] sm:$0xf]
      %v886 = vld [vmem:[%s212 + $0x70] sm:$0xf]
      %v887 = vld [vmem:[%s212 + $0x74] sm:$0xf]
      %v888 = vld [vmem:[%s212 + $0x78] sm:$0xf]
      %v889 = vld [vmem:[%s212 + $0x7c] sm:$0xf]
      %v890 = vld [vmem:[%s212 + $0x80] sm:$0xf]
      %v891 = vld [vmem:[%s212 + $0x84] sm:$0xf]
      %v892 = vld [vmem:[%s212 + $0x88] sm:$0xf]
      %v893 = vld [vmem:[%s212 + $0x8c] sm:$0xf]
      %v894 = vld [vmem:[%s212 + $0x90] sm:$0xf]
      %v895 = vld [vmem:[%s212 + $0x94] sm:$0xf]
      %v896 = vld [vmem:[%s212 + $0x98] sm:$0xf]
      %v897 = vld [vmem:[%s212 + $0x9c] sm:$0xf]
      %v898 = vld [vmem:[%s212 + $0xa0] sm:$0xf]
      %v899 = vld [vmem:[%s212 + $0xa4] sm:$0xf]
      %v900 = vld [vmem:[%s212 + $0xa8] sm:$0xf]
      %v901 = vld [vmem:[%s212 + $0xac] sm:$0xf]
      %v902 = vld [vmem:[%s212 + $0xb0] sm:$0xf]
      %v903 = vld [vmem:[%s212 + $0xb4] sm:$0xf]
      %v904 = vld [vmem:[%s212 + $0xb8] sm:$0xf]
      %v905 = vld [vmem:[%s212 + $0xbc] sm:$0xf]
      %v906 = vld [vmem:[%s212 + $0xc0] sm:$0xf]
      %v907 = vld [vmem:[%s212 + $0xc4] sm:$0xf]
      %v908 = vld [vmem:[%s212 + $0xc8] sm:$0xf]
      %v909 = vld [vmem:[%s212 + $0xcc] sm:$0xf]
      %v910 = vld [vmem:[%s212 + $0xd0] sm:$0xf]
      %v911 = vld [vmem:[%s212 + $0xd4] sm:$0xf]
      %v912 = vld [vmem:[%s212 + $0xd8] sm:$0xf]
      %v913 = vld [vmem:[%s212 + $0xdc] sm:$0xf]
      %v914 = vld [vmem:[%s212 + $0xe0] sm:$0xf]
      %v915 = vld [vmem:[%s212 + $0xe4] sm:$0xf]
      %v916 = vld [vmem:[%s212 + $0xe8] sm:$0xf]
      %v917 = vld [vmem:[%s212 + $0xec] sm:$0xf]
      %v918 = vld [vmem:[%s212 + $0xf0] sm:$0xf]
      %v919 = vld [vmem:[%s212 + $0xf4] sm:$0xf]
      %v920 = vld [vmem:[%s212 + $0xf8] sm:$0xf]
      %v921 = vld [vmem:[%s212 + $0xfc] sm:$0xf]
      %v922 = vld [vmem:[%s212 + $0x100] sm:$0xf]
      %v923 = vld [vmem:[%s212 + $0x104] sm:$0xf]
      %v924 = vld [vmem:[%s212 + $0x108] sm:$0xf]
      %v925 = vld [vmem:[%s212 + $0x10c] sm:$0xf]
      %v926 = vld [vmem:[%s212 + $0x110] sm:$0xf]
      %v927 = vld [vmem:[%s212 + $0x114] sm:$0xf]
      %v928 = vld [vmem:[%s212 + $0x118] sm:$0xf]
      %v929 = vld [vmem:[%s212 + $0x11c] sm:$0xf]
      %v930 = vld [vmem:[%s212 + $0x120] sm:$0xf]
      %v931 = vld [vmem:[%s212 + $0x124] sm:$0xf]
      %v932 = vld [vmem:[%s212 + $0x128] sm:$0xf]
      %v933 = vld [vmem:[%s212 + $0x12c] sm:$0xf]
      %v934 = vld [vmem:[%s212 + $0x130] sm:$0xf]
      %v935 = vld [vmem:[%s212 + $0x134] sm:$0xf]
      %v936 = vld [vmem:[%s212 + $0x138] sm:$0xf]
      %v937 = vld [vmem:[%s212 + $0x13c] sm:$0xf]
      %v938 = vld [vmem:[%s212 + $0x140] sm:$0xf]
      %v939 = vld [vmem:[%s212 + $0x144] sm:$0xf]
      %v940 = vld [vmem:[%s212 + $0x148] sm:$0xf]
      %v941 = vld [vmem:[%s212 + $0x14c] sm:$0xf]
      %v942 = vld [vmem:[%s212 + $0x150] sm:$0xf]
      %v943 = vld [vmem:[%s212 + $0x154] sm:$0xf]
      %v944 = vld [vmem:[%s212 + $0x158] sm:$0xf]
      %v945 = vld [vmem:[%s212 + $0x15c] sm:$0xf]
      %v946 = vld [vmem:[%s212 + $0x160] sm:$0xf]
      %v947 = vld [vmem:[%s212 + $0x164] sm:$0xf]
      %v948 = vld [vmem:[%s212 + $0x168] sm:$0xf]
      %v949 = vld [vmem:[%s212 + $0x16c] sm:$0xf]
      %v950 = vld [vmem:[%s212 + $0x170] sm:$0xf]
      %v951 = vld [vmem:[%s212 + $0x174] sm:$0xf]
      %v952 = vld [vmem:[%s212 + $0x178] sm:$0xf]
      %v953 = vld [vmem:[%s212 + $0x17c] sm:$0xf]
      %v954 = vld [vmem:[%s212 + $0x180] sm:$0xf]
      %v955 = vld [vmem:[%s212 + $0x184] sm:$0xf]
      %v956 = vld [vmem:[%s212 + $0x188] sm:$0xf]
      %v957 = vld [vmem:[%s212 + $0x18c] sm:$0xf]
      %v958 = vld [vmem:[%s212 + $0x190] sm:$0xf]
      %v959 = vld [vmem:[%s212 + $0x194] sm:$0xf]
      %v960 = vld [vmem:[%s212 + $0x198] sm:$0xf]
      %v961 = vld [vmem:[%s212 + $0x19c] sm:$0xf]
      %v962 = vld [vmem:[%s212 + $0x1a0] sm:$0xf]
      %v963 = vld [vmem:[%s212 + $0x1a4] sm:$0xf]
      %v964 = vld [vmem:[%s212 + $0x1a8] sm:$0xf]
      %v965 = vld [vmem:[%s212 + $0x1ac] sm:$0xf]
      %v966 = vld [vmem:[%s212 + $0x1b0] sm:$0xf]
      %v967 = vld [vmem:[%s212 + $0x1b4] sm:$0xf]
      %v968 = vld [vmem:[%s212 + $0x1b8] sm:$0xf]
      %v969 = vld [vmem:[%s212 + $0x1bc] sm:$0xf]
      %v970 = vld [vmem:[%s212 + $0x1c0] sm:$0xf]
      %v971 = vld [vmem:[%s212 + $0x1c4] sm:$0xf]
      %v972 = vld [vmem:[%s212 + $0x1c8] sm:$0xf]
      %v973 = vld [vmem:[%s212 + $0x1cc] sm:$0xf]
      %v974 = vld [vmem:[%s212 + $0x1d0] sm:$0xf]
      %v975 = vld [vmem:[%s212 + $0x1d4] sm:$0xf]
      %v976 = vld [vmem:[%s212 + $0x1d8] sm:$0xf]
      %v977 = vld [vmem:[%s212 + $0x1dc] sm:$0xf]
      %v978 = vld [vmem:[%s212 + $0x1e0] sm:$0xf]
      %v979 = vld [vmem:[%s212 + $0x1e4] sm:$0xf]
      %v980 = vld [vmem:[%s212 + $0x1e8] sm:$0xf]
      %v981 = vld [vmem:[%s212 + $0x1ec] sm:$0xf]
      %v982 = vld [vmem:[%s212 + $0x1f0] sm:$0xf]
      %v983 = vld [vmem:[%s212 + $0x1f4] sm:$0xf]
      %v984 = vld [vmem:[%s212 + $0x1f8] sm:$0xf]
      %v985 = vld [vmem:[%s212 + $0x1fc] sm:$0xf]
      %v986 = vld [vmem:[%s212 + $0x200] sm:$0xf]
      %v987 = vld [vmem:[%s212 + $0x204] sm:$0xf]
      %v988 = vld [vmem:[%s212 + $0x208] sm:$0xf]
      %v989 = vld [vmem:[%s212 + $0x20c] sm:$0xf]
      %v990 = vld [vmem:[%s212 + $0x210] sm:$0xf]
      %v991 = vld [vmem:[%s212 + $0x214] sm:$0xf]
      %v992 = vld [vmem:[%s212 + $0x218] sm:$0xf]
      %v993 = vld [vmem:[%s212 + $0x21c] sm:$0xf]
      %v994 = vld [vmem:[%s212 + $0x220] sm:$0xf]
      %v995 = vld [vmem:[%s212 + $0x224] sm:$0xf]
      %v996 = vld [vmem:[%s212 + $0x228] sm:$0xf]
      %v997 = vld [vmem:[%s212 + $0x22c] sm:$0xf]
      %v998 = vld [vmem:[%s212 + $0x230] sm:$0xf]
      %v999 = vld [vmem:[%s212 + $0x234] sm:$0xf]
      %v1000 = vld [vmem:[%s212 + $0x238] sm:$0xf]
      %v1001 = vld [vmem:[%s212 + $0x23c] sm:$0xf]
      %v1002 = vld [vmem:[%s219] sm:$0x1]
      %v1004 = vlaneseq
      %v1005 = vshrl.u32 %v1004, 7
      %v1006 = vsub.s32 0, %v1005
      %v1007 = vrot.slane %v1002, %v1006
      %v1153 = vunpack.c.l.b16 %v858
      %v1154 = vunpack.c.l.b16 %v859
      %v1155 = vunpack.c.l.b16 %v860
      %v1156 = vunpack.c.l.b16 %v861
      %v1157 = vunpack.c.l.b16 %v862
      %v1158 = vunpack.c.l.b16 %v863
      %v1159 = vunpack.c.l.b16 %v864
      %v1160 = vunpack.c.l.b16 %v865
      %v1161 = vunpack.c.l.b16 %v866
      %v1162 = vunpack.c.l.b16 %v867
      %v1163 = vunpack.c.l.b16 %v868
      %v1164 = vunpack.c.l.b16 %v869
      %v1165 = vunpack.c.l.b16 %v870
      %v1166 = vunpack.c.l.b16 %v871
      %v1167 = vunpack.c.l.b16 %v872
      %v1168 = vunpack.c.l.b16 %v873
      %v1169 = vunpack.c.l.b16 %v874
      %v1170 = vunpack.c.l.b16 %v875
      %v1171 = vunpack.c.l.b16 %v876
      %v1172 = vunpack.c.l.b16 %v877
      %v1173 = vunpack.c.l.b16 %v878
      %v1174 = vunpack.c.l.b16 %v879
      %v1175 = vunpack.c.l.b16 %v880
      %v1176 = vunpack.c.l.b16 %v881
      %v1177 = vunpack.c.l.b16 %v882
      %v1178 = vunpack.c.l.b16 %v883
      %v1179 = vunpack.c.l.b16 %v884
      %v1180 = vunpack.c.l.b16 %v885
      %v1181 = vunpack.c.l.b16 %v886
      %v1182 = vunpack.c.l.b16 %v887
      %v1183 = vunpack.c.l.b16 %v888
      %v1184 = vunpack.c.l.b16 %v889
      %v1185 = vunpack.c.l.b16 %v890
      %v1186 = vunpack.c.l.b16 %v891
      %v1187 = vunpack.c.l.b16 %v892
      %v1188 = vunpack.c.l.b16 %v893
      %v1189 = vunpack.c.l.b16 %v894
      %v1190 = vunpack.c.l.b16 %v895
      %v1191 = vunpack.c.l.b16 %v896
      %v1192 = vunpack.c.l.b16 %v897
      %v1193 = vunpack.c.l.b16 %v898
      %v1194 = vunpack.c.l.b16 %v899
      %v1195 = vunpack.c.l.b16 %v900
      %v1196 = vunpack.c.l.b16 %v901
      %v1197 = vunpack.c.l.b16 %v902
      %v1198 = vunpack.c.l.b16 %v903
      %v1199 = vunpack.c.l.b16 %v904
      %v1200 = vunpack.c.l.b16 %v905
      %v1201 = vunpack.c.l.b16 %v906
      %v1202 = vunpack.c.l.b16 %v907
      %v1203 = vunpack.c.l.b16 %v908
      %v1204 = vunpack.c.l.b16 %v909
      %v1205 = vunpack.c.l.b16 %v910
      %v1206 = vunpack.c.l.b16 %v911
      %v1207 = vunpack.c.l.b16 %v912
      %v1208 = vunpack.c.l.b16 %v913
      %v1209 = vunpack.c.l.b16 %v914
      %v1210 = vunpack.c.l.b16 %v915
      %v1211 = vunpack.c.l.b16 %v916
      %v1212 = vunpack.c.l.b16 %v917
      %v1213 = vunpack.c.l.b16 %v918
      %v1214 = vunpack.c.l.b16 %v919
      %v1215 = vunpack.c.l.b16 %v920
      %v1216 = vunpack.c.l.b16 %v921
      %v1217 = vunpack.c.l.b16 %v922
      %v1218 = vunpack.c.l.b16 %v923
      %v1219 = vunpack.c.l.b16 %v924
      %v1220 = vunpack.c.l.b16 %v925
      %v1221 = vunpack.c.l.b16 %v926
      %v1222 = vunpack.c.l.b16 %v927
      %v1223 = vunpack.c.l.b16 %v928
      %v1224 = vunpack.c.l.b16 %v929
      %v1225 = vunpack.c.l.b16 %v930
      %v1226 = vunpack.c.l.b16 %v931
      %v1227 = vunpack.c.l.b16 %v932
      %v1228 = vunpack.c.l.b16 %v933
      %v1229 = vunpack.c.l.b16 %v934
      %v1230 = vunpack.c.l.b16 %v935
      %v1231 = vunpack.c.l.b16 %v936
      %v1232 = vunpack.c.l.b16 %v937
      %v1233 = vunpack.c.l.b16 %v938
      %v1234 = vunpack.c.l.b16 %v939
      %v1235 = vunpack.c.l.b16 %v940
      %v1236 = vunpack.c.l.b16 %v941
      %v1237 = vunpack.c.l.b16 %v942
      %v1238 = vunpack.c.l.b16 %v943
      %v1239 = vunpack.c.l.b16 %v944
      %v1240 = vunpack.c.l.b16 %v945
      %v1241 = vunpack.c.l.b16 %v946
      %v1242 = vunpack.c.l.b16 %v947
      %v1243 = vunpack.c.l.b16 %v948
      %v1244 = vunpack.c.l.b16 %v949
      %v1245 = vunpack.c.l.b16 %v950
      %v1246 = vunpack.c.l.b16 %v951
      %v1247 = vunpack.c.l.b16 %v952
      %v1248 = vunpack.c.l.b16 %v953
      %v1249 = vunpack.c.l.b16 %v954
      %v1250 = vunpack.c.l.b16 %v955
      %v1251 = vunpack.c.l.b16 %v956
      %v1252 = vunpack.c.l.b16 %v957
      %v1253 = vunpack.c.l.b16 %v958
      %v1254 = vunpack.c.l.b16 %v959
      %v1255 = vunpack.c.l.b16 %v960
      %v1256 = vunpack.c.l.b16 %v961
      %v1257 = vunpack.c.l.b16 %v962
      %v1258 = vunpack.c.l.b16 %v963
      %v1259 = vunpack.c.l.b16 %v964
      %v1260 = vunpack.c.l.b16 %v965
      %v1261 = vunpack.c.l.b16 %v966
      %v1262 = vunpack.c.l.b16 %v967
      %v1263 = vunpack.c.l.b16 %v968
      %v1264 = vunpack.c.l.b16 %v969
      %v1265 = vunpack.c.l.b16 %v970
      %v1266 = vunpack.c.l.b16 %v971
      %v1267 = vunpack.c.l.b16 %v972
      %v1268 = vunpack.c.l.b16 %v973
      %v1269 = vunpack.c.l.b16 %v974
      %v1270 = vunpack.c.l.b16 %v975
      %v1271 = vunpack.c.l.b16 %v976
      %v1272 = vunpack.c.l.b16 %v977
      %v1273 = vunpack.c.l.b16 %v978
      %v1274 = vunpack.c.l.b16 %v979
      %v1275 = vunpack.c.l.b16 %v980
      %v1276 = vunpack.c.l.b16 %v981
      %v1277 = vunpack.c.l.b16 %v982
      %v1278 = vunpack.c.l.b16 %v983
      %v1279 = vunpack.c.l.b16 %v984
      %v1280 = vunpack.c.l.b16 %v985
      %v1281 = vunpack.c.l.b16 %v986
      %v1282 = vunpack.c.l.b16 %v987
      %v1283 = vunpack.c.l.b16 %v988
      %v1284 = vunpack.c.l.b16 %v989
      %v1285 = vunpack.c.l.b16 %v990
      %v1286 = vunpack.c.l.b16 %v991
      %v1287 = vunpack.c.l.b16 %v992
      %v1288 = vunpack.c.l.b16 %v993
      %v1289 = vunpack.c.l.b16 %v994
      %v1290 = vunpack.c.l.b16 %v995
      %v1291 = vunpack.c.l.b16 %v996
      %v1292 = vunpack.c.l.b16 %v997
      %v1293 = vunpack.c.l.b16 %v998
      %v1294 = vunpack.c.l.b16 %v999
      %v1295 = vunpack.c.l.b16 %v1000
      %v1296 = vunpack.c.l.b16 %v1001
      %v1297 = vpack.c.b16 %v1154, %v1153
      %v1298 = vpack.c.b16 %v1156, %v1155
      %v1299 = vpack.c.b16 %v1158, %v1157
      %v1300 = vpack.c.b16 %v1160, %v1159
      %v1301 = vpack.c.b16 %v1162, %v1161
      %v1302 = vpack.c.b16 %v1164, %v1163
      %v1303 = vpack.c.b16 %v1166, %v1165
      %v1304 = vpack.c.b16 %v1168, %v1167
      %v1305 = vpack.c.b16 %v1170, %v1169
      %v1306 = vpack.c.b16 %v1172, %v1171
      %v1307 = vpack.c.b16 %v1174, %v1173
      %v1308 = vpack.c.b16 %v1176, %v1175
      %v1309 = vpack.c.b16 %v1178, %v1177
      %v1310 = vpack.c.b16 %v1180, %v1179
      %v1311 = vpack.c.b16 %v1182, %v1181
      %v1312 = vpack.c.b16 %v1184, %v1183
      %v1313 = vpack.c.b16 %v1186, %v1185
      %v1314 = vpack.c.b16 %v1188, %v1187
      %v1315 = vpack.c.b16 %v1190, %v1189
      %v1316 = vpack.c.b16 %v1192, %v1191
      %v1317 = vpack.c.b16 %v1194, %v1193
      %v1318 = vpack.c.b16 %v1196, %v1195
      %v1319 = vpack.c.b16 %v1198, %v1197
      %v1320 = vpack.c.b16 %v1200, %v1199
      %v1321 = vpack.c.b16 %v1202, %v1201
      %v1322 = vpack.c.b16 %v1204, %v1203
      %v1323 = vpack.c.b16 %v1206, %v1205
      %v1324 = vpack.c.b16 %v1208, %v1207
      %v1325 = vpack.c.b16 %v1210, %v1209
      %v1326 = vpack.c.b16 %v1212, %v1211
      %v1327 = vpack.c.b16 %v1214, %v1213
      %v1328 = vpack.c.b16 %v1216, %v1215
      %v1329 = vpack.c.b16 %v1218, %v1217
      %v1330 = vpack.c.b16 %v1220, %v1219
      %v1331 = vpack.c.b16 %v1222, %v1221
      %v1332 = vpack.c.b16 %v1224, %v1223
      %v1333 = vpack.c.b16 %v1226, %v1225
      %v1334 = vpack.c.b16 %v1228, %v1227
      %v1335 = vpack.c.b16 %v1230, %v1229
      %v1336 = vpack.c.b16 %v1232, %v1231
      %v1337 = vpack.c.b16 %v1234, %v1233
      %v1338 = vpack.c.b16 %v1236, %v1235
      %v1339 = vpack.c.b16 %v1238, %v1237
      %v1340 = vpack.c.b16 %v1240, %v1239
      %v1341 = vpack.c.b16 %v1242, %v1241
      %v1342 = vpack.c.b16 %v1244, %v1243
      %v1343 = vpack.c.b16 %v1246, %v1245
      %v1344 = vpack.c.b16 %v1248, %v1247
      %v1345 = vpack.c.b16 %v1250, %v1249
      %v1346 = vpack.c.b16 %v1252, %v1251
      %v1347 = vpack.c.b16 %v1254, %v1253
      %v1348 = vpack.c.b16 %v1256, %v1255
      %v1349 = vpack.c.b16 %v1258, %v1257
      %v1350 = vpack.c.b16 %v1260, %v1259
      %v1351 = vpack.c.b16 %v1262, %v1261
      %v1352 = vpack.c.b16 %v1264, %v1263
      %v1353 = vpack.c.b16 %v1266, %v1265
      %v1354 = vpack.c.b16 %v1268, %v1267
      %v1355 = vpack.c.b16 %v1270, %v1269
      %v1356 = vpack.c.b16 %v1272, %v1271
      %v1357 = vpack.c.b16 %v1274, %v1273
      %v1358 = vpack.c.b16 %v1276, %v1275
      %v1359 = vpack.c.b16 %v1278, %v1277
      %v1360 = vpack.c.b16 %v1280, %v1279
      %v1361 = vpack.c.b16 %v1282, %v1281
      %v1362 = vpack.c.b16 %v1284, %v1283
      %v1363 = vpack.c.b16 %v1286, %v1285
      %v1364 = vpack.c.b16 %v1288, %v1287
      %v1365 = vpack.c.b16 %v1290, %v1289
      %v1366 = vpack.c.b16 %v1292, %v1291
      %v1367 = vpack.c.b16 %v1294, %v1293
      %v1368 = vpack.c.b16 %v1296, %v1295
      %1441 = vmatprep.subr.bf16.mxu0 0
      %1442 = vmatpush1.bf16.msra.mxu0 %v1297
      %1443 = vmatprep.subr.bf16.mxu0 0
      %1444 = vmatpush1.bf16.msra.mxu0 %v1298
      %1445 = vmatprep.subr.bf16.mxu0 0
      %1446 = vmatpush1.bf16.msra.mxu0 %v1299
      %1447 = vmatprep.subr.bf16.mxu0 0
      %1448 = vmatpush1.bf16.msra.mxu0 %v1300
      %1449 = vmatprep.subr.bf16.mxu0 0
      %1450 = vmatpush1.bf16.msra.mxu0 %v1301
      %1451 = vmatprep.subr.bf16.mxu0 0
      %1452 = vmatpush1.bf16.msra.mxu0 %v1302
      %1453 = vmatprep.subr.bf16.mxu0 0
      %1454 = vmatpush1.bf16.msra.mxu0 %v1303
      %1455 = vmatprep.subr.bf16.mxu0 0
      %1456 = vmatpush1.bf16.msra.mxu0 %v1304
      %1457 = vmatprep.subr.bf16.mxu0 0
      %1458 = vmatpush1.bf16.msra.mxu0 %v1305
      %1459 = vmatprep.subr.bf16.mxu0 0
      %1460 = vmatpush1.bf16.msra.mxu0 %v1306
      %1461 = vmatprep.subr.bf16.mxu0 0
      %1462 = vmatpush1.bf16.msra.mxu0 %v1307
      %1463 = vmatprep.subr.bf16.mxu0 0
      %1464 = vmatpush1.bf16.msra.mxu0 %v1308
      %1465 = vmatprep.subr.bf16.mxu0 0
      %1466 = vmatpush1.bf16.msra.mxu0 %v1309
      %1467 = vmatprep.subr.bf16.mxu0 0
      %1468 = vmatpush1.bf16.msra.mxu0 %v1310
      %1469 = vmatprep.subr.bf16.mxu0 0
      %1470 = vmatpush1.bf16.msra.mxu0 %v1311
      %1471 = vmatprep.subr.bf16.mxu0 0
      %1472 = vmatpush1.bf16.msra.mxu0 %v1312
      %1473 = vmatprep.mubr.bf16.mxu0 %v787
      %1474 = vmatmul.mubr.bf16.gmra.mrb[0].mxu0 %v786
      %v1475 = vpop.f32.mrb[0].mxu0
      %v1476 = vadd.f32 %v1007, %v1475
      %v1477 = vpop.f32.mrb[0].mxu0
      %v1478 = vpop.f32.mrb[0].mxu0
      %v1479 = vadd.f32 %v1007, %v1478
      %v1480 = vpop.f32.mrb[0].mxu0
      %1481 = vmatprep.mubr.bf16.mxu0 %v796
      %1482 = vmatmul.mubr.bf16.gmra.mrb[0].mxu0 %v795
      %v1483 = vpop.f32.mrb[0].mxu0
      %v1484 = vadd.f32 %v1007, %v1483
      %v1485 = vpop.f32.mrb[0].mxu0
      %v1486 = vpop.f32.mrb[0].mxu0
      %v1487 = vadd.f32 %v1007, %v1486
      %v1488 = vpop.f32.mrb[0].mxu0
      %1489 = vmatprep.mubr.bf16.mxu0 %v805
      %1490 = vmatmul.mubr.bf16.gmra.mrb[0].mxu0 %v804
      %v1491 = vpop.f32.mrb[0].mxu0
      %v1492 = vadd.f32 %v1007, %v1491
      %v1493 = vpop.f32.mrb[0].mxu0
      %v1494 = vpop.f32.mrb[0].mxu0
      %v1495 = vadd.f32 %v1007, %v1494
      %v1496 = vpop.f32.mrb[0].mxu0
      %1497 = vmatprep.mubr.bf16.mxu0 %v814
      %1498 = vmatmul.mubr.bf16.gmra.mrb[0].mxu0 %v813
      %v1499 = vpop.f32.mrb[0].mxu0
      %v1500 = vadd.f32 %v1007, %v1499
      %v1501 = vpop.f32.mrb[0].mxu0
      %v1502 = vpop.f32.mrb[0].mxu0
      %v1503 = vadd.f32 %v1007, %v1502
      %v1504 = vpop.f32.mrb[0].mxu0
      %1505 = vmatprep.mubr.bf16.mxu0 %v823
      %1506 = vmatmul.mubr.bf16.gmra.mrb[0].mxu0 %v822
      %v1507 = vpop.f32.mrb[0].mxu0
      %v1508 = vadd.f32 %v1007, %v1507
      %v1509 = vpop.f32.mrb[0].mxu0
      %v1510 = vpop.f32.mrb[0].mxu0
      %v1511 = vadd.f32 %v1007, %v1510
      %v1512 = vpop.f32.mrb[0].mxu0
      %1513 = vmatprep.mubr.bf16.mxu0 %v832
      %1514 = vmatmul.mubr.bf16.gmra.mrb[0].mxu0 %v831
      %v1515 = vpop.f32.mrb[0].mxu0
      %v1516 = vadd.f32 %v1007, %v1515
      %v1517 = vpop.f32.mrb[0].mxu0
      %v1518 = vpop.f32.mrb[0].mxu0
      %v1519 = vadd.f32 %v1007, %v1518
      %v1520 = vpop.f32.mrb[0].mxu0
      %1521 = vmatprep.mubr.bf16.mxu0 %v841
      %1522 = vmatmul.mubr.bf16.gmra.mrb[0].mxu0 %v840
      %v1523 = vpop.f32.mrb[0].mxu0
      %v1524 = vadd.f32 %v1007, %v1523
      %v1525 = vpop.f32.mrb[0].mxu0
      %v1526 = vpop.f32.mrb[0].mxu0
      %v1527 = vadd.f32 %v1007, %v1526
      %v1528 = vpop.f32.mrb[0].mxu0
      %1529 = vmatprep.mubr.bf16.mxu0 %v850
      %1530 = vmatmul.mubr.bf16.gmra.mrb[0].mxu0 %v849
      %v1531 = vpop.f32.mrb[0].mxu0
      %v1532 = vadd.f32 %v1007, %v1531
      %v1533 = vpop.f32.mrb[0].mxu0
      %v1534 = vpop.f32.mrb[0].mxu0
      %v1535 = vadd.f32 %v1007, %v1534
      %v1536 = vpop.f32.mrb[0].mxu0
      %1537 = vdwg.mxu0
      %1538 = vmatprep.subr.bf16.mxu0 0
      %1539 = vmatpush1.bf16.msra.mxu0 %v1313
      %1540 = vmatprep.subr.bf16.mxu0 0
      %1541 = vmatpush1.bf16.msra.mxu0 %v1314
      %1542 = vmatprep.subr.bf16.mxu0 0
      %1543 = vmatpush1.bf16.msra.mxu0 %v1315
      %1544 = vmatprep.subr.bf16.mxu0 0
      %1545 = vmatpush1.bf16.msra.mxu0 %v1316
      %1546 = vmatprep.subr.bf16.mxu0 0
      %1547 = vmatpush1.bf16.msra.mxu0 %v1317
      %1548 = vmatprep.subr.bf16.mxu0 0
      %1549 = vmatpush1.bf16.msra.mxu0 %v1318
      %1550 = vmatprep.subr.bf16.mxu0 0
      %1551 = vmatpush1.bf16.msra.mxu0 %v1319
      %1552 = vmatprep.subr.bf16.mxu0 0
      %1553 = vmatpush1.bf16.msra.mxu0 %v1320
      %1554 = vmatprep.subr.bf16.mxu0 0
      %1555 = vmatpush1.bf16.msra.mxu0 %v1321
      %1556 = vmatprep.subr.bf16.mxu0 0
      %1557 = vmatpush1.bf16.msra.mxu0 %v1322
      %1558 = vmatprep.subr.bf16.mxu0 0
      %1559 = vmatpush1.bf16.msra.mxu0 %v1323
      %1560 = vmatprep.subr.bf16.mxu0 0
      %1561 = vmatpush1.bf16.msra.mxu0 %v1324
      %1562 = vmatprep.subr.bf16.mxu0 0
      %1563 = vmatpush1.bf16.msra.mxu0 %v1325
      %1564 = vmatprep.subr.bf16.mxu0 0
      %1565 = vmatpush1.bf16.msra.mxu0 %v1326
      %1566 = vmatprep.subr.bf16.mxu0 0
      %1567 = vmatpush1.bf16.msra.mxu0 %v1327
      %1568 = vmatprep.subr.bf16.mxu0 0
      %1569 = vmatpush1.bf16.msra.mxu0 %v1328
      %1570 = vmatprep.mubr.bf16.mxu0 %v789
      %1571 = vmatmul.mubr.bf16.gmra.mrb[0].mxu0 %v788
      %v1572 = vpop.f32.mrb[0].mxu0
      %v1573 = vadd.f32 %v1476, %v1572
      %v1574 = vpop.f32.mrb[0].mxu0
      %v1575 = vpop.f32.mrb[0].mxu0
      %v1576 = vadd.f32 %v1479, %v1575
      %v1577 = vpop.f32.mrb[0].mxu0
      %1578 = vmatprep.mubr.bf16.mxu0 %v798
      %1579 = vmatmul.mubr.bf16.gmra.mrb[0].mxu0 %v797
      %v1580 = vpop.f32.mrb[0].mxu0
      %v1581 = vadd.f32 %v1484, %v1580
      %v1582 = vpop.f32.mrb[0].mxu0
      %v1583 = vpop.f32.mrb[0].mxu0
      %v1584 = vadd.f32 %v1487, %v1583
      %v1585 = vpop.f32.mrb[0].mxu0
      %1586 = vmatprep.mubr.bf16.mxu0 %v807
      %1587 = vmatmul.mubr.bf16.gmra.mrb[0].mxu0 %v806
      %v1588 = vpop.f32.mrb[0].mxu0
      %v1589 = vadd.f32 %v1492, %v1588
      %v1590 = vpop.f32.mrb[0].mxu0
      %v1591 = vpop.f32.mrb[0].mxu0
      %v1592 = vadd.f32 %v1495, %v1591
      %v1593 = vpop.f32.mrb[0].mxu0
      %1594 = vmatprep.mubr.bf16.mxu0 %v816
      %1595 = vmatmul.mubr.bf16.gmra.mrb[0].mxu0 %v815
      %v1596 = vpop.f32.mrb[0].mxu0
      %v1597 = vadd.f32 %v1500, %v1596
      %v1598 = vpop.f32.mrb[0].mxu0
      %v1599 = vpop.f32.mrb[0].mxu0
      %v1600 = vadd.f32 %v1503, %v1599
      %v1601 = vpop.f32.mrb[0].mxu0
      %1602 = vmatprep.mubr.bf16.mxu0 %v825
      %1603 = vmatmul.mubr.bf16.gmra.mrb[0].mxu0 %v824
      %v1604 = vpop.f32.mrb[0].mxu0
      %v1605 = vadd.f32 %v1508, %v1604
      %v1606 = vpop.f32.mrb[0].mxu0
      %v1607 = vpop.f32.mrb[0].mxu0
      %v1608 = vadd.f32 %v1511, %v1607
      %v1609 = vpop.f32.mrb[0].mxu0
      %1610 = vmatprep.mubr.bf16.mxu0 %v834
      %1611 = vmatmul.mubr.bf16.gmra.mrb[0].mxu0 %v833
      %v1612 = vpop.f32.mrb[0].mxu0
      %v1613 = vadd.f32 %v1516, %v1612
      %v1614 = vpop.f32.mrb[0].mxu0
      %v1615 = vpop.f32.mrb[0].mxu0
      %v1616 = vadd.f32 %v1519, %v1615
      %v1617 = vpop.f32.mrb[0].mxu0
      %1618 = vmatprep.mubr.bf16.mxu0 %v843
      %1619 = vmatmul.mubr.bf16.gmra.mrb[0].mxu0 %v842
      %v1620 = vpop.f32.mrb[0].mxu0
      %v1621 = vadd.f32 %v1524, %v1620
      %v1622 = vpop.f32.mrb[0].mxu0
      %v1623 = vpop.f32.mrb[0].mxu0
      %v1624 = vadd.f32 %v1527, %v1623
      %v1625 = vpop.f32.mrb[0].mxu0
      %1626 = vmatprep.mubr.bf16.mxu0 %v852
      %1627 = vmatmul.mubr.bf16.gmra.mrb[0].mxu0 %v851
      %v1628 = vpop.f32.mrb[0].mxu0
      %v1629 = vadd.f32 %v1532, %v1628
      %v1630 = vpop.f32.mrb[0].mxu0
      %v1631 = vpop.f32.mrb[0].mxu0
      %v1632 = vadd.f32 %v1535, %v1631
      %v1633 = vpop.f32.mrb[0].mxu0
      %1634 = vdwg.mxu0
      %1635 = vmatprep.subr.bf16.mxu0 0
      %1636 = vmatpush1.bf16.msra.mxu0 %v1329
      %1637 = vmatprep.subr.bf16.mxu0 0
      %1638 = vmatpush1.bf16.msra.mxu0 %v1330
      %1639 = vmatprep.subr.bf16.mxu0 0
      %1640 = vmatpush1.bf16.msra.mxu0 %v1331
      %1641 = vmatprep.subr.bf16.mxu0 0
      %1642 = vmatpush1.bf16.msra.mxu0 %v1332
      %1643 = vmatprep.subr.bf16.mxu0 0
      %1644 = vmatpush1.bf16.msra.mxu0 %v1333
      %1645 = vmatprep.subr.bf16.mxu0 0
      %1646 = vmatpush1.bf16.msra.mxu0 %v1334
      %1647 = vmatprep.subr.bf16.mxu0 0
      %1648 = vmatpush1.bf16.msra.mxu0 %v1335
      %1649 = vmatprep.subr.bf16.mxu0 0
      %1650 = vmatpush1.bf16.msra.mxu0 %v1336
      %1651 = vmatprep.subr.bf16.mxu0 0
      %1652 = vmatpush1.bf16.msra.mxu0 %v1337
      %1653 = vmatprep.subr.bf16.mxu0 0
      %1654 = vmatpush1.bf16.msra.mxu0 %v1338
      %1655 = vmatprep.subr.bf16.mxu0 0
      %1656 = vmatpush1.bf16.msra.mxu0 %v1339
      %1657 = vmatprep.subr.bf16.mxu0 0
      %1658 = vmatpush1.bf16.msra.mxu0 %v1340
      %1659 = vmatprep.subr.bf16.mxu0 0
      %1660 = vmatpush1.bf16.msra.mxu0 %v1341
      %1661 = vmatprep.subr.bf16.mxu0 0
      %1662 = vmatpush1.bf16.msra.mxu0 %v1342
      %1663 = vmatprep.subr.bf16.mxu0 0
      %1664 = vmatpush1.bf16.msra.mxu0 %v1343
      %1665 = vmatprep.subr.bf16.mxu0 0
      %1666 = vmatpush1.bf16.msra.mxu0 %v1344
      %1667 = vmatprep.mubr.bf16.mxu0 %v791
      %1668 = vmatmul.mubr.bf16.gmra.mrb[0].mxu0 %v790
      %v1669 = vpop.f32.mrb[0].mxu0
      %v1670 = vadd.f32 %v1573, %v1669
      %v1671 = vpop.f32.mrb[0].mxu0
      %v1672 = vpop.f32.mrb[0].mxu0
      %v1673 = vadd.f32 %v1576, %v1672
      %v1674 = vpop.f32.mrb[0].mxu0
      %1675 = vmatprep.mubr.bf16.mxu0 %v800
      %1676 = vmatmul.mubr.bf16.gmra.mrb[0].mxu0 %v799
      %v1677 = vpop.f32.mrb[0].mxu0
      %v1678 = vadd.f32 %v1581, %v1677
      %v1679 = vpop.f32.mrb[0].mxu0
      %v1680 = vpop.f32.mrb[0].mxu0
      %v1681 = vadd.f32 %v1584, %v1680
      %v1682 = vpop.f32.mrb[0].mxu0
      %1683 = vmatprep.mubr.bf16.mxu0 %v809
      %1684 = vmatmul.mubr.bf16.gmra.mrb[0].mxu0 %v808
      %v1685 = vpop.f32.mrb[0].mxu0
      %v1686 = vadd.f32 %v1589, %v1685
      %v1687 = vpop.f32.mrb[0].mxu0
      %v1688 = vpop.f32.mrb[0].mxu0
      %v1689 = vadd.f32 %v1592, %v1688
      %v1690 = vpop.f32.mrb[0].mxu0
      %1691 = vmatprep.mubr.bf16.mxu0 %v818
      %1692 = vmatmul.mubr.bf16.gmra.mrb[0].mxu0 %v817
      %v1693 = vpop.f32.mrb[0].mxu0
      %v1694 = vadd.f32 %v1597, %v1693
      %v1695 = vpop.f32.mrb[0].mxu0
      %v1696 = vpop.f32.mrb[0].mxu0
      %v1697 = vadd.f32 %v1600, %v1696
      %v1698 = vpop.f32.mrb[0].mxu0
      %1699 = vmatprep.mubr.bf16.mxu0 %v827
      %1700 = vmatmul.mubr.bf16.gmra.mrb[0].mxu0 %v826
      %v1701 = vpop.f32.mrb[0].mxu0
      %v1702 = vadd.f32 %v1605, %v1701
      %v1703 = vpop.f32.mrb[0].mxu0
      %v1704 = vpop.f32.mrb[0].mxu0
      %v1705 = vadd.f32 %v1608, %v1704
      %v1706 = vpop.f32.mrb[0].mxu0
      %1707 = vmatprep.mubr.bf16.mxu0 %v836
      %1708 = vmatmul.mubr.bf16.gmra.mrb[0].mxu0 %v835
      %v1709 = vpop.f32.mrb[0].mxu0
      %v1710 = vadd.f32 %v1613, %v1709
      %v1711 = vpop.f32.mrb[0].mxu0
      %v1712 = vpop.f32.mrb[0].mxu0
      %v1713 = vadd.f32 %v1616, %v1712
      %v1714 = vpop.f32.mrb[0].mxu0
      %1715 = vmatprep.mubr.bf16.mxu0 %v845
      %1716 = vmatmul.mubr.bf16.gmra.mrb[0].mxu0 %v844
      %v1717 = vpop.f32.mrb[0].mxu0
      %v1718 = vadd.f32 %v1621, %v1717
      %v1719 = vpop.f32.mrb[0].mxu0
      %v1720 = vpop.f32.mrb[0].mxu0
      %v1721 = vadd.f32 %v1624, %v1720
      %v1722 = vpop.f32.mrb[0].mxu0
      %1723 = vmatprep.mubr.bf16.mxu0 %v854
      %1724 = vmatmul.mubr.bf16.gmra.mrb[0].mxu0 %v853
      %v1725 = vpop.f32.mrb[0].mxu0
      %v1726 = vadd.f32 %v1629, %v1725
      %v1727 = vpop.f32.mrb[0].mxu0
      %v1728 = vpop.f32.mrb[0].mxu0
      %v1729 = vadd.f32 %v1632, %v1728
      %v1730 = vpop.f32.mrb[0].mxu0
      %1731 = vdwg.mxu0
      %1732 = vmatprep.subr.bf16.mxu0 0
      %1733 = vmatpush1.bf16.msra.mxu0 %v1345
      %1734 = vmatprep.subr.bf16.mxu0 0
      %1735 = vmatpush1.bf16.msra.mxu0 %v1346
      %1736 = vmatprep.subr.bf16.mxu0 0
      %1737 = vmatpush1.bf16.msra.mxu0 %v1347
      %1738 = vmatprep.subr.bf16.mxu0 0
      %1739 = vmatpush1.bf16.msra.mxu0 %v1348
      %1740 = vmatprep.subr.bf16.mxu0 0
      %1741 = vmatpush1.bf16.msra.mxu0 %v1349
      %1742 = vmatprep.subr.bf16.mxu0 0
      %1743 = vmatpush1.bf16.msra.mxu0 %v1350
      %1744 = vmatprep.subr.bf16.mxu0 0
      %1745 = vmatpush1.bf16.msra.mxu0 %v1351
      %1746 = vmatprep.subr.bf16.mxu0 0
      %1747 = vmatpush1.bf16.msra.mxu0 %v1352
      %1748 = vmatprep.subr.bf16.mxu0 0
      %1749 = vmatpush1.bf16.msra.mxu0 %v1353
      %1750 = vmatprep.subr.bf16.mxu0 0
      %1751 = vmatpush1.bf16.msra.mxu0 %v1354
      %1752 = vmatprep.subr.bf16.mxu0 0
      %1753 = vmatpush1.bf16.msra.mxu0 %v1355
      %1754 = vmatprep.subr.bf16.mxu0 0
      %1755 = vmatpush1.bf16.msra.mxu0 %v1356
      %1756 = vmatprep.subr.bf16.mxu0 0
      %1757 = vmatpush1.bf16.msra.mxu0 %v1357
      %1758 = vmatprep.subr.bf16.mxu0 0
      %1759 = vmatpush1.bf16.msra.mxu0 %v1358
      %1760 = vmatprep.subr.bf16.mxu0 0
      %1761 = vmatpush1.bf16.msra.mxu0 %v1359
      %1762 = vmatprep.subr.bf16.mxu0 0
      %1763 = vmatpush1.bf16.msra.mxu0 %v1360
      %1764 = vmatprep.mubr.bf16.mxu0 %v793
      %1765 = vmatmul.mubr.bf16.gmra.mrb[0].mxu0 %v792
      %v1766 = vpop.f32.mrb[0].mxu0
      %v1767 = vadd.f32 %v1670, %v1766
      %v1768 = vpop.f32.mrb[0].mxu0
      %v1769 = vpop.f32.mrb[0].mxu0
      %v1770 = vadd.f32 %v1673, %v1769
      %v1771 = vpop.f32.mrb[0].mxu0
      %1772 = vmatprep.mubr.bf16.mxu0 %v802
      %1773 = vmatmul.mubr.bf16.gmra.mrb[0].mxu0 %v801
      %v1774 = vpop.f32.mrb[0].mxu0
      %v1775 = vadd.f32 %v1678, %v1774
      %v1776 = vpop.f32.mrb[0].mxu0
      %v1777 = vpop.f32.mrb[0].mxu0
      %v1778 = vadd.f32 %v1681, %v1777
      %v1779 = vpop.f32.mrb[0].mxu0
      %1780 = vmatprep.mubr.bf16.mxu0 %v811
      %1781 = vmatmul.mubr.bf16.gmra.mrb[0].mxu0 %v810
      %v1782 = vpop.f32.mrb[0].mxu0
      %v1783 = vadd.f32 %v1686, %v1782
      %v1784 = vpop.f32.mrb[0].mxu0
      %v1785 = vpop.f32.mrb[0].mxu0
      %v1786 = vadd.f32 %v1689, %v1785
      %v1787 = vpop.f32.mrb[0].mxu0
      %1788 = vmatprep.mubr.bf16.mxu0 %v820
      %1789 = vmatmul.mubr.bf16.gmra.mrb[0].mxu0 %v819
      %v1790 = vpop.f32.mrb[0].mxu0
      %v1791 = vadd.f32 %v1694, %v1790
      %v1792 = vpop.f32.mrb[0].mxu0
      %v1793 = vpop.f32.mrb[0].mxu0
      %v1794 = vadd.f32 %v1697, %v1793
      %v1795 = vpop.f32.mrb[0].mxu0
      %1796 = vmatprep.mubr.bf16.mxu0 %v829
      %1797 = vmatmul.mubr.bf16.gmra.mrb[0].mxu0 %v828
      %v1798 = vpop.f32.mrb[0].mxu0
      %v1799 = vadd.f32 %v1702, %v1798
      %v1800 = vpop.f32.mrb[0].mxu0
      %v1801 = vpop.f32.mrb[0].mxu0
      %v1802 = vadd.f32 %v1705, %v1801
      %v1803 = vpop.f32.mrb[0].mxu0
      %1804 = vmatprep.mubr.bf16.mxu0 %v838
      %1805 = vmatmul.mubr.bf16.gmra.mrb[0].mxu0 %v837
      %v1806 = vpop.f32.mrb[0].mxu0
      %v1807 = vadd.f32 %v1710, %v1806
      %v1808 = vpop.f32.mrb[0].mxu0
      %v1809 = vpop.f32.mrb[0].mxu0
      %v1810 = vadd.f32 %v1713, %v1809
      %v1811 = vpop.f32.mrb[0].mxu0
      %1812 = vmatprep.mubr.bf16.mxu0 %v847
      %1813 = vmatmul.mubr.bf16.gmra.mrb[0].mxu0 %v846
      %v1814 = vpop.f32.mrb[0].mxu0
      %v1815 = vadd.f32 %v1718, %v1814
      %v1816 = vpop.f32.mrb[0].mxu0
      %v1817 = vpop.f32.mrb[0].mxu0
      %v1818 = vadd.f32 %v1721, %v1817
      %v1819 = vpop.f32.mrb[0].mxu0
      %1820 = vmatprep.mubr.bf16.mxu0 %v856
      %1821 = vmatmul.mubr.bf16.gmra.mrb[0].mxu0 %v855
      %v1822 = vpop.f32.mrb[0].mxu0
      %v1823 = vadd.f32 %v1726, %v1822
      %v1824 = vpop.f32.mrb[0].mxu0
      %v1825 = vpop.f32.mrb[0].mxu0
      %v1826 = vadd.f32 %v1729, %v1825
      %v1827 = vpop.f32.mrb[0].mxu0
      %1828 = vdwg.mxu0
      %1829 = vmatprep.subr.bf16.mxu0 0
      %1830 = vmatpush1.bf16.msra.mxu0 %v1361
      %1831 = vmatprep.subr.bf16.mxu0 0
      %1832 = vmatpush1.bf16.msra.mxu0 %v1362
      %1833 = vmatprep.subr.bf16.mxu0 0
      %1834 = vmatpush1.bf16.msra.mxu0 %v1363
      %1835 = vmatprep.subr.bf16.mxu0 0
      %1836 = vmatpush1.bf16.msra.mxu0 %v1364
      %1837 = vmatprep.subr.bf16.mxu0 0
      %1838 = vmatpush1.bf16.msra.mxu0 %v1365
      %1839 = vmatprep.subr.bf16.mxu0 0
      %1840 = vmatpush1.bf16.msra.mxu0 %v1366
      %1841 = vmatprep.subr.bf16.mxu0 0
      %1842 = vmatpush1.bf16.msra.mxu0 %v1367
      %1843 = vmatprep.subr.bf16.mxu0 0
      %1844 = vmatpush1.bf16.msra.mxu0 %v1368
      %1845 = vmatprep.subr.bf16.mxu0 0
      %1846 = vmatpush1.bf16.msra.mxu0 0
      %1847 = vmatprep.subr.bf16.mxu0 0
      %1848 = vmatpush1.bf16.msra.mxu0 0
      %1849 = vmatprep.subr.bf16.mxu0 0
      %1850 = vmatpush1.bf16.msra.mxu0 0
      %1851 = vmatprep.subr.bf16.mxu0 0
      %1852 = vmatpush1.bf16.msra.mxu0 0
      %1853 = vmatprep.subr.bf16.mxu0 0
      %1854 = vmatpush1.bf16.msra.mxu0 0
      %1855 = vmatprep.subr.bf16.mxu0 0
      %1856 = vmatpush1.bf16.msra.mxu0 0
      %1857 = vmatprep.subr.bf16.mxu0 0
      %1858 = vmatpush1.bf16.msra.mxu0 0
      %1859 = vmatprep.subr.bf16.mxu0 0
      %1860 = vmatpush1.bf16.msra.mxu0 0
      %1861 = vmatprep.mubr.bf16.mxu0 0
      %1862 = vmatmul.mubr.bf16.gmra.mrb[0].mxu0 %v794
      %v1863 = vpop.f32.mrb[0].mxu0
      %v1864 = vadd.f32 %v1767, %v1863
      %v1865 = vpop.f32.mrb[0].mxu0
      %v1866 = vpop.f32.mrb[0].mxu0
      %v1867 = vadd.f32 %v1770, %v1866
      %v1868 = vpop.f32.mrb[0].mxu0
      %1869 = vmatprep.mubr.bf16.mxu0 0
      %1870 = vmatmul.mubr.bf16.gmra.mrb[0].mxu0 %v803
      %v1871 = vpop.f32.mrb[0].mxu0
      %v1872 = vadd.f32 %v1775, %v1871
      %v1873 = vpop.f32.mrb[0].mxu0
      %v1874 = vpop.f32.mrb[0].mxu0
      %v1875 = vadd.f32 %v1778, %v1874
      %v1876 = vpop.f32.mrb[0].mxu0
      %1877 = vmatprep.mubr.bf16.mxu0 0
      %1878 = vmatmul.mubr.bf16.gmra.mrb[0].mxu0 %v812
      %v1879 = vpop.f32.mrb[0].mxu0
      %v1880 = vadd.f32 %v1783, %v1879
      %v1881 = vpop.f32.mrb[0].mxu0
      %v1882 = vpop.f32.mrb[0].mxu0
      %v1883 = vadd.f32 %v1786, %v1882
      %v1884 = vpop.f32.mrb[0].mxu0
      %1885 = vmatprep.mubr.bf16.mxu0 0
      %1886 = vmatmul.mubr.bf16.gmra.mrb[0].mxu0 %v821
      %v1887 = vpop.f32.mrb[0].mxu0
      %v1888 = vadd.f32 %v1791, %v1887
      %v1889 = vpop.f32.mrb[0].mxu0
      %v1890 = vpop.f32.mrb[0].mxu0
      %v1891 = vadd.f32 %v1794, %v1890
      %v1892 = vpop.f32.mrb[0].mxu0
      %1893 = vmatprep.mubr.bf16.mxu0 0
      %1894 = vmatmul.mubr.bf16.gmra.mrb[0].mxu0 %v830
      %v1895 = vpop.f32.mrb[0].mxu0
      %v1896 = vadd.f32 %v1799, %v1895
      %v1897 = vpop.f32.mrb[0].mxu0
      %v1898 = vpop.f32.mrb[0].mxu0
      %v1899 = vadd.f32 %v1802, %v1898
      %v1900 = vpop.f32.mrb[0].mxu0
      %1901 = vmatprep.mubr.bf16.mxu0 0
      %1902 = vmatmul.mubr.bf16.gmra.mrb[0].mxu0 %v839
      %v1903 = vpop.f32.mrb[0].mxu0
      %v1904 = vadd.f32 %v1807, %v1903
      %v1905 = vpop.f32.mrb[0].mxu0
      %v1906 = vpop.f32.mrb[0].mxu0
      %v1907 = vadd.f32 %v1810, %v1906
      %v1908 = vpop.f32.mrb[0].mxu0
      %1909 = vmatprep.mubr.bf16.mxu0 0
      %1910 = vmatmul.mubr.bf16.gmra.mrb[0].mxu0 %v848
      %v1911 = vpop.f32.mrb[0].mxu0
      %v1912 = vadd.f32 %v1815, %v1911
      %v1913 = vpop.f32.mrb[0].mxu0
      %v1914 = vpop.f32.mrb[0].mxu0
      %v1915 = vadd.f32 %v1818, %v1914
      %v1916 = vpop.f32.mrb[0].mxu0
      %1917 = vmatprep.mubr.bf16.mxu0 0
      %1918 = vmatmul.mubr.bf16.gmra.mrb[0].mxu0 %v857
      %v1919 = vpop.f32.mrb[0].mxu0
      %v1920 = vadd.f32 %v1823, %v1919
      %v1921 = vpop.f32.mrb[0].mxu0
      %v1922 = vpop.f32.mrb[0].mxu0
      %v1923 = vadd.f32 %v1826, %v1922
      %v1924 = vpop.f32.mrb[0].mxu0
      %1925 = vdwg.mxu0
      %p1926 = scmp.eq.s32.totalorder %s19, 4
      %p1927 = scmp.ne.s32.totalorder %s19, 4
      // Predicated region
      $region37: #{header_forward.1} parent=31 // pred_check
        %p1928 = pneg %p1927
      $region38: #{header_forward.1} parent=31 // pred_check_branch
        %1930 = sbr.rel (%p1928) target = $region40
      $region39: #{header_forward.1} parent=31 // pred_region
        %v1931 = vmax.f32 %v1864, 0.0
        %v1932 = vmax.f32 %v1867, 0.0
        %v1933 = vmax.f32 %v1872, 0.0
        %v1934 = vmax.f32 %v1875, 0.0
        %v1935 = vmax.f32 %v1880, 0.0
        %v1936 = vmax.f32 %v1883, 0.0
        %v1937 = vmax.f32 %v1888, 0.0
        %v1938 = vmax.f32 %v1891, 0.0
        %v1939 = vmax.f32 %v1896, 0.0
        %v1940 = vmax.f32 %v1899, 0.0
        %v1941 = vmax.f32 %v1904, 0.0
        %v1942 = vmax.f32 %v1907, 0.0
        %v1943 = vmax.f32 %v1912, 0.0
        %v1944 = vmax.f32 %v1915, 0.0
        %v1945 = vmax.f32 %v1920, 0.0
        %v1946 = vmax.f32 %v1923, 0.0
        %1947 = vst [vmem:[#allocation2] sm:$0xff] %v1931
        %1948 = vst [vmem:[#allocation2 + $0x8] sm:$0xff] %v1932
        %1949 = vst [vmem:[#allocation2 + $0x10] sm:$0xff] %v1933
        %1950 = vst [vmem:[#allocation2 + $0x18] sm:$0xff] %v1934
        %1951 = vst [vmem:[#allocation2 + $0x20] sm:$0xff] %v1935
        %1952 = vst [vmem:[#allocation2 + $0x28] sm:$0xff] %v1936
        %1953 = vst [vmem:[#allocation2 + $0x30] sm:$0xff] %v1937
        %1954 = vst [vmem:[#allocation2 + $0x38] sm:$0xff] %v1938
        %1955 = vst [vmem:[#allocation2 + $0x40] sm:$0xff] %v1939
        %1956 = vst [vmem:[#allocation2 + $0x48] sm:$0xff] %v1940
        %1957 = vst [vmem:[#allocation2 + $0x50] sm:$0xff] %v1941
        %1958 = vst [vmem:[#allocation2 + $0x58] sm:$0xff] %v1942
        %1959 = vst [vmem:[#allocation2 + $0x60] sm:$0xff] %v1943
        %1960 = vst [vmem:[#allocation2 + $0x68] sm:$0xff] %v1944
        %1961 = vst [vmem:[#allocation2 + $0x70] sm:$0xff] %v1945
        %1962 = vst [vmem:[#allocation2 + $0x78] sm:$0xff] %v1946
      $region40: #{header_forward.1} parent=31 // pred_fallthru
        _
      %p1963 = scmp.eq.s32.totalorder %s18, 0
      %p1964 = pnand %p1926, %p1963
      %p1965 = pneg %p1964
      // Predicated region
      $region41: #{header_forward.1} parent=31 // pred_check
        _
      $region42: #{header_forward.1} parent=31 // pred_check_branch
        %1967 = sbr.rel (%p1964) target = $region44
      $region43: #{header_forward.1} parent=31 // pred_region
        %v1968 = vxor.u32 %v1864, 2147483648
        %v1969 = vxor.u32 %v1867, 2147483648
        %v1970 = vxor.u32 %v1872, 2147483648
        %v1971 = vxor.u32 %v1875, 2147483648
        %v1972 = vxor.u32 %v1880, 2147483648
        %v1973 = vxor.u32 %v1883, 2147483648
        %v1974 = vxor.u32 %v1888, 2147483648
        %v1975 = vxor.u32 %v1891, 2147483648
        %v1976 = vxor.u32 %v1896, 2147483648
        %v1977 = vxor.u32 %v1899, 2147483648
        %v1978 = vxor.u32 %v1904, 2147483648
        %v1979 = vxor.u32 %v1907, 2147483648
        %v1980 = vxor.u32 %v1912, 2147483648
        %v1981 = vxor.u32 %v1915, 2147483648
        %v1982 = vxor.u32 %v1920, 2147483648
        %v1983 = vxor.u32 %v1923, 2147483648
        %v1984 = vmul.f32 %v1968, 1.442695
        %v1985 = vpow.pop %v1984
        %v1986 = vmul.f32 %v1969, 1.442695
        %v1987 = vpow.pop %v1986
        %v1988 = vmul.f32 %v1970, 1.442695
        %v1989 = vpow.pop %v1988
        %v1990 = vmul.f32 %v1971, 1.442695
        %v1991 = vpow.pop %v1990
        %v1992 = vmul.f32 %v1972, 1.442695
        %v1993 = vpow.pop %v1992
        %v1994 = vmul.f32 %v1973, 1.442695
        %v1995 = vpow.pop %v1994
        %v1996 = vmul.f32 %v1974, 1.442695
        %v1997 = vpow.pop %v1996
        %v1998 = vmul.f32 %v1975, 1.442695
        %v1999 = vpow.pop %v1998
        %v2000 = vmul.f32 %v1976, 1.442695
        %v2001 = vpow.pop %v2000
        %v2002 = vmul.f32 %v1977, 1.442695
        %v2003 = vpow.pop %v2002
        %v2004 = vmul.f32 %v1978, 1.442695
        %v2005 = vpow.pop %v2004
        %v2006 = vmul.f32 %v1979, 1.442695
        %v2007 = vpow.pop %v2006
        %v2008 = vmul.f32 %v1980, 1.442695
        %v2009 = vpow.pop %v2008
        %v2010 = vmul.f32 %v1981, 1.442695
        %v2011 = vpow.pop %v2010
        %v2012 = vmul.f32 %v1982, 1.442695
        %v2013 = vpow.pop %v2012
        %v2014 = vmul.f32 %v1983, 1.442695
        %v2015 = vpow.pop %v2014
        %v2016 = vadd.f32 %v1985, 1.0
        %v2017 = vadd.f32 %v1987, 1.0
        %v2018 = vadd.f32 %v1989, 1.0
        %v2019 = vadd.f32 %v1991, 1.0
        %v2020 = vadd.f32 %v1993, 1.0
        %v2021 = vadd.f32 %v1995, 1.0
        %v2022 = vadd.f32 %v1997, 1.0
        %v2023 = vadd.f32 %v1999, 1.0
        %v2024 = vadd.f32 %v2001, 1.0
        %v2025 = vadd.f32 %v2003, 1.0
        %v2026 = vadd.f32 %v2005, 1.0
        %v2027 = vadd.f32 %v2007, 1.0
        %v2028 = vadd.f32 %v2009, 1.0
        %v2029 = vadd.f32 %v2011, 1.0
        %v2030 = vadd.f32 %v2013, 1.0
        %v2031 = vadd.f32 %v2015, 1.0
        %v2032 = vrcp.pop %v2016
        %v2033 = vmul.f32 1.0, %v2032
        %v2034 = vrcp.pop %v2017
        %v2035 = vmul.f32 1.0, %v2034
        %v2036 = vrcp.pop %v2018
        %v2037 = vmul.f32 1.0, %v2036
        %v2038 = vrcp.pop %v2019
        %v2039 = vmul.f32 1.0, %v2038
        %v2040 = vrcp.pop %v2020
        %v2041 = vmul.f32 1.0, %v2040
        %v2042 = vrcp.pop %v2021
        %v2043 = vmul.f32 1.0, %v2042
        %v2044 = vrcp.pop %v2022
        %v2045 = vmul.f32 1.0, %v2044
        %v2046 = vrcp.pop %v2023
        %v2047 = vmul.f32 1.0, %v2046
        %v2048 = vrcp.pop %v2024
        %v2049 = vmul.f32 1.0, %v2048
        %v2050 = vrcp.pop %v2025
        %v2051 = vmul.f32 1.0, %v2050
        %v2052 = vrcp.pop %v2026
        %v2053 = vmul.f32 1.0, %v2052
        %v2054 = vrcp.pop %v2027
        %v2055 = vmul.f32 1.0, %v2054
        %v2056 = vrcp.pop %v2028
        %v2057 = vmul.f32 1.0, %v2056
        %v2058 = vrcp.pop %v2029
        %v2059 = vmul.f32 1.0, %v2058
        %v2060 = vrcp.pop %v2030
        %v2061 = vmul.f32 1.0, %v2060
        %v2062 = vrcp.pop %v2031
        %v2063 = vmul.f32 1.0, %v2062
        %2064 = vst [vmem:[%s224] sm:$0xff] %v2033
        %2065 = vst [vmem:[%s224 + $0x8] sm:$0xff] %v2035
        %2066 = vst [vmem:[%s224 + $0x10] sm:$0xff] %v2037
        %2067 = vst [vmem:[%s224 + $0x18] sm:$0xff] %v2039
        %2068 = vst [vmem:[%s224 + $0x20] sm:$0xff] %v2041
        %2069 = vst [vmem:[%s224 + $0x28] sm:$0xff] %v2043
        %2070 = vst [vmem:[%s224 + $0x30] sm:$0xff] %v2045
        %2071 = vst [vmem:[%s224 + $0x38] sm:$0xff] %v2047
        %2072 = vst [vmem:[%s224 + $0x40] sm:$0xff] %v2049
        %2073 = vst [vmem:[%s224 + $0x48] sm:$0xff] %v2051
        %2074 = vst [vmem:[%s224 + $0x50] sm:$0xff] %v2053
        %2075 = vst [vmem:[%s224 + $0x58] sm:$0xff] %v2055
        %2076 = vst [vmem:[%s224 + $0x60] sm:$0xff] %v2057
        %2077 = vst [vmem:[%s224 + $0x68] sm:$0xff] %v2059
        %2078 = vst [vmem:[%s224 + $0x70] sm:$0xff] %v2061
        %2079 = vst [vmem:[%s224 + $0x78] sm:$0xff] %v2063
      $region44: #{header_forward.1} parent=31 // pred_fallthru
        _
      %p2080 = scmp.ne.s32.totalorder %s18, 0
      %p2081 = pnand %p1926, %p2080
      %p2082 = pneg %p2081
      // Predicated region
      $region45: #{header_forward.1} parent=31 // pred_check
        _
      $region46: #{header_forward.1} parent=31 // pred_check_branch
        %2084 = sbr.rel (%p2081) target = $region48
      $region47: #{header_forward.1} parent=31 // pred_region
        %2085 = vst [vmem:[%s224] sm:$0xff] %v1864
        %2086 = vst [vmem:[%s224 + $0x8] sm:$0xff] %v1867
        %2087 = vst [vmem:[%s224 + $0x10] sm:$0xff] %v1872
        %2088 = vst [vmem:[%s224 + $0x18] sm:$0xff] %v1875
        %2089 = vst [vmem:[%s224 + $0x20] sm:$0xff] %v1880
        %2090 = vst [vmem:[%s224 + $0x28] sm:$0xff] %v1883
        %2091 = vst [vmem:[%s224 + $0x30] sm:$0xff] %v1888
        %2092 = vst [vmem:[%s224 + $0x38] sm:$0xff] %v1891
        %2093 = vst [vmem:[%s224 + $0x40] sm:$0xff] %v1896
        %2094 = vst [vmem:[%s224 + $0x48] sm:$0xff] %v1899
        %2095 = vst [vmem:[%s224 + $0x50] sm:$0xff] %v1904
        %2096 = vst [vmem:[%s224 + $0x58] sm:$0xff] %v1907
        %2097 = vst [vmem:[%s224 + $0x60] sm:$0xff] %v1912
        %2098 = vst [vmem:[%s224 + $0x68] sm:$0xff] %v1915
        %2099 = vst [vmem:[%s224 + $0x70] sm:$0xff] %v1920
        %2100 = vst [vmem:[%s224 + $0x78] sm:$0xff] %v1923
      $region48: #{header_forward.1} parent=31 // pred_fallthru
        _
      %p2101 = scmp.lt.s32.totalorder %s18, 1
      %s2102 = scalar_select %p2101, %s18, 1
      %s2103 = smul.addr %s2102, 16
      %s2104 = smul.addr %s2103, 8
      %s2105 = scalar_lea.vmem %s3, %s2104
      // Predicated region
      $region49: #{header_forward.1} parent=31 // pred_check
        %p2106 = pneg %p121
      $region50: #{header_forward.1} parent=31 // pred_check_branch
        %2108 = sbr.rel (%p2106) target = $region52
      $region51: #{header_forward.1} parent=31 // pred_region
        _
      $region52: #{header_forward.1} parent=31 // pred_fallthru
        _
    $region32: #{header_forward.1} parent=5 // pred_fallthru
      _
    %p2109 = scmp.le.s32.totalorder 2, %s9
    // Predicated region
    $region53: #{header_forward.1} parent=5 // pred_check
      %p2110 = pneg %p2109
    $region54: #{header_forward.1} parent=5 // pred_check_branch
      %2112 = sbr.rel (%p2110) target = $region56
    $region55: #{header_forward.1} parent=5 // pred_region
      %s2113 = ssub.s32 %s9, 2
      // Predicated region
      $region57: #{header_forward.1} parent=55 // pred_check
        %p2114 = pneg %p127
      $region58: #{header_forward.1} parent=55 // pred_check_branch
        %2116 = sbr.rel (%p2114) target = $region60
      $region59: #{header_forward.1} parent=55 // pred_region
        %p2117 = scmp.lt.s32.totalorder %s20, 1
        %s2118 = scalar_select %p2117, %s20, 1
        %s2119 = smul.addr %s2118, 16
        %s2120 = smul.addr %s2119, 8
        %s2121 = scalar_lea.vmem %s3, %s2120
      $region60: #{header_forward.1} parent=55 // pred_fallthru
        _
    $region56: #{header_forward.1} parent=5 // pred_fallthru
      _
  $region6: #{header_forward.1} parent=0 // loop_footer
    %s13 = sadd.s32 1, %s9
  $region7: #{header_forward.1} parent=0 // loop_footer_branch
    %8 = sbr.rel target = $region3
  $region8: #{header_forward.1} parent=0 // loop_exit
    _

</llo_original>
